<compile_context>
chip_gen: v5e
topology: v5e:2x2
jax: 0.10.0
libtpu: 0.0.40
codegen_flags: <defaults>
</compile_context>

<pallas_src>
import functools

import jax
import jax.numpy as jnp
from jax.experimental import pallas as pl
from jax.experimental.pallas import tpu as pltpu


def _cdiv(a, b):
    return -(-a // b)


def _round_up(x, m):
    return _cdiv(x, m) * m


def _pad_act_dim(act_dim):
    """Smallest act_dim_pad >= act_dim such that F * act_dim_pad hits a full
    128-lane output block (divisor of 128 below 128, multiple of 128 above)."""
    if act_dim >= 128:
        return _round_up(act_dim, 128)
    d = act_dim
    while 128 % d:
        d += 1
    return d


def _pick_fold(obs_dim, h1, h2, act_dim_pad, dtype_bytes, max_weight_bytes=4 << 20):
    """Minimum lane-dense fold F (= 128 // act_dim_pad), halved only if the
    block-diagonal weights (which grow as F**2) would blow the VMEM budget."""
    per = obs_dim * h1 + h1 * h2 + h2 * act_dim_pad
    f = max(1, 128 // max(1, act_dim_pad))
    while f > 1 and f * f * per * dtype_bytes > max_weight_bytes:
        f //= 2
    return f


def _block_diag(w, fold):
    """(din, dout) -> (fold*din, fold*dout) block-diagonal (exact, no sums)."""
    din, dout = w.shape
    eye = jnp.eye(fold, dtype=w.dtype)
    return jnp.einsum("fg,io->figo", eye, w).reshape(fold * din, fold * dout)


def prepare_actor_params(params, *, compute_dtype=jnp.bfloat16, fold=None):
    """Build the folded (block-diagonal) bf16 weights / tiled biases ONCE.

    Call this right after init (or whenever the raw params change); the
    returned `prepared` dict is what `black_box_actor_forward` consumes, so
    the per-call path does no weight re-materialization.
    """
    obs_dim, h1 = params["w1"].shape
    h2 = params["w2"].shape[1]
    act_dim = params["w3"].shape[1]
    act_dim_pad = _pad_act_dim(act_dim)

    dtype_bytes = jnp.dtype(compute_dtype).itemsize
    F = (_pick_fold(obs_dim, h1, h2, act_dim_pad, dtype_bytes)
         if fold is None else max(1, int(fold)))

    w3 = params["w3"]
    if act_dim_pad != act_dim:
        # Zero-pad output columns: padded lanes produce tanh(0)*act_limit = 0
        # and are sliced away after the kernel; keeps the store unmasked.
        w3 = jnp.pad(w3, ((0, 0), (0, act_dim_pad - act_dim)))

    prepared = {
        "w1": _block_diag(params["w1"].astype(compute_dtype), F),
        "b1": jnp.tile(params["b1"].astype(jnp.float32), (1, F)),
        "w2": _block_diag(params["w2"].astype(compute_dtype), F),
        "b2": jnp.tile(params["b2"].astype(jnp.float32), (1, F)),
        "w3": _block_diag(w3.astype(compute_dtype), F),
    }
    meta = {
        "F": F, "obs_dim": obs_dim, "h1": h1, "h2": h2,
        "act_dim": act_dim, "act_dim_pad": act_dim_pad,
        "compute_dtype": compute_dtype,
    }
    return prepared, meta


def _actor_kernel(obs_ref, w1_ref, b1_ref, w2_ref, b2_ref, w3_ref, out_ref,
                  *, act_limit, compute_dtype):
    # obs_ref: (tbf, F*obs_dim) f32 tile (streamed); weights: bf16, resident.
    x = obs_ref[...].astype(compute_dtype)

    # Hidden layer 1: Linear (f32 MXU accumulation) + bias, ReLU on packed
    # bf16 vregs (exact: ReLU commutes with round-to-nearest).
    h = jnp.dot(x, w1_ref[...], preferred_element_type=jnp.float32) + b1_ref[...]
    h = jnp.maximum(h.astype(compute_dtype), 0)

    # Hidden layer 2: Linear + bias + ReLU.
    h = jnp.dot(h, w2_ref[...], preferred_element_type=jnp.float32) + b2_ref[...]
    h = jnp.maximum(h.astype(compute_dtype), 0)

    # Output layer: Linear (no bias) + Tanh, scaled by act_limit (f32).
    y = jnp.dot(h, w3_ref[...], preferred_element_type=jnp.float32)
    out_ref[...] = (act_limit * jnp.tanh(y)).astype(out_ref.dtype)


def black_box_actor_forward(obs, prepared, meta, act_limit, *, block_rows=8192):
    """obs: (batch, obs_dim) f32.  `prepared`/`meta` from prepare_actor_params."""
    batch, obs_dim = obs.shape
    F = meta["F"]
    h1, h2 = meta["h1"], meta["h2"]
    act_dim, act_dim_pad = meta["act_dim"], meta["act_dim_pad"]
    compute_dtype = meta["compute_dtype"]
    assert obs_dim == meta["obs_dim"], "obs_dim mismatch with prepared params"

    # --- batch tiling: `tbf` folded rows per grid step (tbf * F real rows).
    # 16-aligned so bf16 vregs (16 sublanes) are fully packed.
    folded_needed = _round_up(_cdiv(batch, F), 16)
    tbf = max(16, _round_up(max(1, block_rows // F), 16))
    tbf = min(tbf, folded_needed)
    # Guarantee >= 2 grid steps when there is enough work, so the "parallel"
    # batch axis actually uses both TensorCores on v7x (no-op on v5e/v6e).
    if folded_needed >= 32:
        tbf = min(tbf, _round_up(_cdiv(folded_needed, 2), 16))
    padded_folded = _round_up(folded_needed, tbf)
    padded_batch = padded_folded * F
    grid = (padded_folded // tbf,)

    # Pad batch with zero rows, fold F rows into the lane axis (row-major
    # reshape -> exact; undone after the kernel).
    if padded_batch != batch:
        obs = jnp.pad(obs, ((0, padded_batch - batch), (0, 0)))
    obs_f = obs.astype(jnp.float32).reshape(padded_folded, F * obs_dim)

    w1, b1, w2, b2, w3 = (prepared[k] for k in ("w1", "b1", "w2", "b2", "w3"))
    dtype_bytes = jnp.dtype(compute_dtype).itemsize
    weight_bytes = int((w1.size + w2.size + w3.size) * dtype_bytes
                       + (b1.size + b2.size) * 4)
    tile_bytes = int(2 * tbf * F * (obs_dim + act_dim_pad) * 4)  # dbl-buffered io
    # Tight VMEM budget: 48 MiB cap leaves headroom on v7x's 64 MiB per TC.
    vmem_limit = int(min(48 << 20, max(16 << 20, 4 * (weight_bytes + tile_bytes))))

    # CostEstimate reflects EXECUTED work: the block-diagonal matmuls run
    # F x the useful MACs.
    cost = pl.CostEstimate(
        flops=int(2 * padded_batch * F * (obs_dim * h1 + h1 * h2 + h2 * act_dim_pad)),
        transcendentals=int(padded_batch * act_dim_pad),
        bytes_accessed=int(4 * padded_batch * (obs_dim + act_dim_pad) + weight_bytes),
    )

    kernel = functools.partial(_actor_kernel, act_limit=float(act_limit),
                               compute_dtype=compute_dtype)

    out_f = pl.pallas_call(
        kernel,
        out_shape=jax.ShapeDtypeStruct((padded_folded, F * act_dim_pad), jnp.float32),
        grid=grid,
        in_specs=[
            pl.BlockSpec((tbf, F * obs_dim), lambda i: (i, 0)),       # streamed obs
            pl.BlockSpec((F * obs_dim, F * h1), lambda i: (0, 0)),    # resident weights
            pl.BlockSpec((1, F * h1), lambda i: (0, 0)),
            pl.BlockSpec((F * h1, F * h2), lambda i: (0, 0)),
            pl.BlockSpec((1, F * h2), lambda i: (0, 0)),
            pl.BlockSpec((F * h2, F * act_dim_pad), lambda i: (0, 0)),
        ],
        out_specs=pl.BlockSpec((tbf, F * act_dim_pad), lambda i: (i, 0)),  # 128 lanes
        compiler_params=pltpu.CompilerParams(
            dimension_semantics=("parallel",),
            vmem_limit_bytes=vmem_limit,
        ),
        cost_estimate=cost,
    )(obs_f, w1, b1, w2, b2, w3)

    # Unfold lanes back into batch rows, drop row padding and act_dim padding.
    return out_f.reshape(padded_batch, act_dim_pad)[:batch, :act_dim]


def init_params(key, obs_dim, hidden_sizes, act_dim):
    """Deterministic init mimicking torch.nn.Linear default (uniform +/- 1/sqrt(fan_in)).
    Weights stored transposed: (in_features, out_features). Last layer has no bias."""
    sizes = [obs_dim] + list(hidden_sizes) + [act_dim]
    keys = jax.random.split(key, 2 * (len(sizes) - 1))
    params = {}
    for j in range(len(sizes) - 1):
        fan_in, fan_out = sizes[j], sizes[j + 1]
        bound = 1.0 / jnp.sqrt(fan_in)
        w = jax.random.uniform(keys[2 * j], (fan_in, fan_out),
                               minval=-bound, maxval=bound, dtype=jnp.float32)
        params[f"w{j + 1}"] = w
        if j < len(sizes) - 2:
            b = jax.random.uniform(keys[2 * j + 1], (1, fan_out),
                                   minval=-bound, maxval=bound, dtype=jnp.float32)
            params[f"b{j + 1}"] = b
    return params


def reference_forward(obs, params, act_limit):
    """Pure f32 reference (matches the PyTorch module's math)."""
    h = jnp.maximum(obs @ params["w1"] + params["b1"], 0.0)
    h = jnp.maximum(h @ params["w2"] + params["b2"], 0.0)
    return act_limit * jnp.tanh(h @ params["w3"])


def reference_forward_bf16(obs, params, act_limit):
    """Reference matching the kernel's numerics (bf16 operands, f32 accumulation)."""
    bf = jnp.bfloat16
    h = jnp.dot(obs.astype(bf), params["w1"].astype(bf),
                preferred_element_type=jnp.float32) + params["b1"]
    h = jnp.maximum(h, 0.0)
    h = jnp.dot(h.astype(bf), params["w2"].astype(bf),
                preferred_element_type=jnp.float32) + params["b2"]
    h = jnp.maximum(h, 0.0)
    y = jnp.dot(h.astype(bf), params["w3"].astype(bf),
                preferred_element_type=jnp.float32)
    return act_limit * jnp.tanh(y)


if __name__ == "__main__":
    obs_dim = 16
    act_dim = 8
    hidden_sizes = (32, 32)   # `activation` = ReLU
    act_limit = 2.0
    batch = 600               # not tile-aligned -> exercises padding; >=2 grid steps

    key = jax.random.PRNGKey(0)
    k_obs, k_params = jax.random.split(key)
    obs = jax.random.normal(k_obs, (batch, obs_dim), dtype=jnp.float32)
    params = init_params(k_params, obs_dim, hidden_sizes, act_dim)

    # Fold / cast the weights ONCE (not per forward call).
    prepared, meta = prepare_actor_params(params)

    out = black_box_actor_forward(obs, prepared, meta, act_limit)
    out = jax.block_until_ready(out)
    assert out.shape == (batch, act_dim)
    assert bool(jnp.all(jnp.isfinite(out)))

    # Tight check vs a reference with identical bf16/f32 numerics.
    ref_bf16 = reference_forward_bf16(obs, params, act_limit)
    assert jnp.allclose(out, ref_bf16, atol=2e-2, rtol=2e-2), "mismatch vs bf16 reference"

    # Loose check vs the pure-f32 PyTorch-equivalent reference.
    ref_f32 = reference_forward(obs, params, act_limit)
    assert jnp.allclose(out, ref_f32, atol=2.5e-1, rtol=2.5e-1), "mismatch vs f32 reference"

    print("KERNEL_OK")
</pallas_src>

<mosaic_0001>
module attributes {stable_mosaic.version = 11 : i64} {
  func.func @_actor_kernel(%arg0: i32, %arg1: memref<32x256xf32, #tpu.memory_space<vmem>>, %arg2: memref<256x512xbf16, #tpu.memory_space<vmem>>, %arg3: memref<1x512xf32, #tpu.memory_space<vmem>>, %arg4: memref<512x512xbf16, #tpu.memory_space<vmem>>, %arg5: memref<1x512xf32, #tpu.memory_space<vmem>>, %arg6: memref<512x128xbf16, #tpu.memory_space<vmem>>, %arg7: memref<32x128xf32, #tpu.memory_space<vmem>>) attributes {dimension_semantics = [#tpu.dimension_semantics<parallel>], iteration_bounds = array<i64: 2>, scalar_prefetch = 0 : i64, scratch_operands = 0 : i64, tpu.core_type = #tpu.core_type<tc>, window_params = [{transform_indices = @transform_0, window_bounds = array<i64: 32, 256>}, {pipeline_mode = #tpu.pipeline_mode<synchronous>, transform_indices = @transform_1, window_bounds = array<i64: 256, 512>}, {pipeline_mode = #tpu.pipeline_mode<synchronous>, transform_indices = @transform_2, window_bounds = array<i64: 1, 512>}, {pipeline_mode = #tpu.pipeline_mode<synchronous>, transform_indices = @transform_3, window_bounds = array<i64: 512, 512>}, {pipeline_mode = #tpu.pipeline_mode<synchronous>, transform_indices = @transform_4, window_bounds = array<i64: 1, 512>}, {pipeline_mode = #tpu.pipeline_mode<synchronous>, transform_indices = @transform_5, window_bounds = array<i64: 512, 128>}, {transform_indices = @transform_6, window_bounds = array<i64: 32, 128>}]} {
    %c0 = arith.constant 0 : index
    %c0_0 = arith.constant 0 : index
    %0 = vector.load %arg1[%c0, %c0_0] : memref<32x256xf32, #tpu.memory_space<vmem>>, vector<32x256xf32>
    %1 = arith.truncf %0 : vector<32x256xf32> to vector<32x256xbf16>
    %c0_1 = arith.constant 0 : index
    %c0_2 = arith.constant 0 : index
    %2 = vector.load %arg2[%c0_1, %c0_2] : memref<256x512xbf16, #tpu.memory_space<vmem>>, vector<256x512xbf16>
    %cst = arith.constant dense<0.000000e+00> : vector<32x512xf32>
    %3 = tpu.matmul %1, %2, %cst {dimension_numbers = #tpu.dot_dimension_numbers<[1], [0], [0], [1], [0, 0, 1, 1], [], []>} : vector<32x256xbf16>, vector<256x512xbf16>, vector<32x512xf32> -> vector<32x512xf32>
    %c0_3 = arith.constant 0 : index
    %c0_4 = arith.constant 0 : index
    %4 = vector.load %arg3[%c0_3, %c0_4] : memref<1x512xf32, #tpu.memory_space<vmem>>, vector<1x512xf32>
    %5 = vector.broadcast %4 : vector<1x512xf32> to vector<32x512xf32>
    %6 = arith.addf %3, %5 : vector<32x512xf32>
    %7 = arith.truncf %6 : vector<32x512xf32> to vector<32x512xbf16>
    %cst_5 = arith.constant 0.000000e+00 : bf16
    %8 = vector.broadcast %cst_5 : bf16 to vector<32x512xbf16>
    %9 = arith.maximumf %7, %8 : vector<32x512xbf16>
    %c0_6 = arith.constant 0 : index
    %c0_7 = arith.constant 0 : index
    %10 = vector.load %arg4[%c0_6, %c0_7] : memref<512x512xbf16, #tpu.memory_space<vmem>>, vector<512x512xbf16>
    %cst_8 = arith.constant dense<0.000000e+00> : vector<32x512xf32>
    %11 = tpu.matmul %9, %10, %cst_8 {dimension_numbers = #tpu.dot_dimension_numbers<[1], [0], [0], [1], [0, 0, 1, 1], [], []>} : vector<32x512xbf16>, vector<512x512xbf16>, vector<32x512xf32> -> vector<32x512xf32>
    %c0_9 = arith.constant 0 : index
    %c0_10 = arith.constant 0 : index
    %12 = vector.load %arg5[%c0_9, %c0_10] : memref<1x512xf32, #tpu.memory_space<vmem>>, vector<1x512xf32>
    %13 = vector.broadcast %12 : vector<1x512xf32> to vector<32x512xf32>
    %14 = arith.addf %11, %13 : vector<32x512xf32>
    %15 = arith.truncf %14 : vector<32x512xf32> to vector<32x512xbf16>
    %cst_11 = arith.constant 0.000000e+00 : bf16
    %16 = vector.broadcast %cst_11 : bf16 to vector<32x512xbf16>
    %17 = arith.maximumf %15, %16 : vector<32x512xbf16>
    %c0_12 = arith.constant 0 : index
    %c0_13 = arith.constant 0 : index
    %18 = vector.load %arg6[%c0_12, %c0_13] : memref<512x128xbf16, #tpu.memory_space<vmem>>, vector<512x128xbf16>
    %cst_14 = arith.constant dense<0.000000e+00> : vector<32x128xf32>
    %19 = tpu.matmul %17, %18, %cst_14 {dimension_numbers = #tpu.dot_dimension_numbers<[1], [0], [0], [1], [0, 0, 1, 1], [], []>} : vector<32x512xbf16>, vector<512x128xbf16>, vector<32x128xf32> -> vector<32x128xf32>
    %20 = math.tanh %19 : vector<32x128xf32>
    %cst_15 = arith.constant 2.000000e+00 : f32
    %21 = vector.broadcast %cst_15 : f32 to vector<32x128xf32>
    %22 = arith.mulf %21, %20 : vector<32x128xf32>
    %c0_16 = arith.constant 0 : index
    %c0_17 = arith.constant 0 : index
    %23 = vector.load %arg7[%c0_16, %c0_17] : memref<32x128xf32, #tpu.memory_space<vmem>>, vector<32x128xf32>
    tpu.vector_store %arg7[%c0_16, %c0_17], %22 {strides = array<i32>} : memref<32x128xf32, #tpu.memory_space<vmem>>, vector<32x128xf32>,
    return
  }
  func.func @transform_0(%arg0: i32) -> (i32, i32) {
    %c0_i32 = arith.constant 0 : i32
    %c0_i32_0 = arith.constant 0 : i32
    return %arg0, %c0_i32 : i32, i32
  }
  func.func @transform_1(%arg0: i32) -> (i32, i32) {
    %c0_i32 = arith.constant 0 : i32
    %c0_i32_0 = arith.constant 0 : i32
    %c0_i32_1 = arith.constant 0 : i32
    return %c0_i32, %c0_i32_0 : i32, i32
  }
  func.func @transform_2(%arg0: i32) -> (i32, i32) {
    %c0_i32 = arith.constant 0 : i32
    %c0_i32_0 = arith.constant 0 : i32
    %c0_i32_1 = arith.constant 0 : i32
    return %c0_i32, %c0_i32_0 : i32, i32
  }
  func.func @transform_3(%arg0: i32) -> (i32, i32) {
    %c0_i32 = arith.constant 0 : i32
    %c0_i32_0 = arith.constant 0 : i32
    %c0_i32_1 = arith.constant 0 : i32
    return %c0_i32, %c0_i32_0 : i32, i32
  }
  func.func @transform_4(%arg0: i32) -> (i32, i32) {
    %c0_i32 = arith.constant 0 : i32
    %c0_i32_0 = arith.constant 0 : i32
    %c0_i32_1 = arith.constant 0 : i32
    return %c0_i32, %c0_i32_0 : i32, i32
  }
  func.func @transform_5(%arg0: i32) -> (i32, i32) {
    %c0_i32 = arith.constant 0 : i32
    %c0_i32_0 = arith.constant 0 : i32
    %c0_i32_1 = arith.constant 0 : i32
    return %c0_i32, %c0_i32_0 : i32, i32
  }
  func.func @transform_6(%arg0: i32) -> (i32, i32) {
    %c0_i32 = arith.constant 0 : i32
    %c0_i32_0 = arith.constant 0 : i32
    return %arg0, %c0_i32 : i32, i32
  }
}

</mosaic_0001>

<llo_original>
// kernel: tpu_custom_call.1
$region0: #{tpu_custom_call.1}
  #allocation0 [shape = 'u32[]', space=smem, size = 0x4, offset = 0x4, fixed_abs, tag = 'smem constant byte address 0x4 - core index']
  #allocation1 [shape = 'u32[72,128]{1,0:T(1,128)}', space=vmem, size = 0x9000, scoped, tag = 'internal scratch']
  %s0 = inlined_call_operand.hbm [shape: f32[64,256], index: 0, kind: input, shape index: {}]
  %s1 = inlined_call_operand.hbm [shape: bf16[256,512], index: 1, kind: input, shape index: {}]
  %s2 = inlined_call_operand.hbm [shape: f32[1,512], index: 2, kind: input, shape index: {}]
  %s3 = inlined_call_operand.hbm [shape: bf16[512,512], index: 3, kind: input, shape index: {}]
  %s4 = inlined_call_operand.hbm [shape: f32[1,512], index: 4, kind: input, shape index: {}]
  %s5 = inlined_call_operand.hbm [shape: bf16[512,128], index: 5, kind: input, shape index: {}]
  %s6 = inlined_call_operand.hbm [shape: f32[64,128], index: 6, kind: output, shape index: {}]
  %s7 = sld [smem:[#allocation0]]
  $region81: #{tpu_custom_call.1} parent=0
    _
  %s9 = ssub.s32 1, %s7
  %s10 = scalar_select 0, %s9, %s7
  $region1: #{tpu_custom_call.1} parent=0
    #allocation2 [shape = 'u8[65536]{0}', space=vmem, size = 0x10000, scoped, tag = 'input window, operand 0']
    #allocation3 [shape = 's32[2]{0}', space=sflag, size = 0x8, scoped, tag = 'scoped memory for tpu_custom_call.1']
    #allocation4 [shape = 's32[2]{0}', space=sflag, size = 0x8, scoped, tag = 'scoped memory for tpu_custom_call.1']
    #allocation5 [shape = 'u8[262144]{0}', space=vmem, size = 0x40000, scoped, tag = 'input window, operand 1, single buffered']
    #allocation6 [shape = 's32[1]{0}', space=sflag, size = 0x4, scoped, tag = 'scoped memory for tpu_custom_call.1']
    #allocation7 [shape = 'u8[2048]{0}', space=vmem, size = 0x800, scoped, tag = 'input window, operand 2, single buffered']
    #allocation8 [shape = 'u8[524288]{0}', space=vmem, size = 0x80000, scoped, tag = 'input window, operand 3, single buffered']
    #allocation9 [shape = 's32[1]{0}', space=sflag, size = 0x4, scoped, tag = 'scoped memory for tpu_custom_call.1']
    #allocation10 [shape = 'u8[2048]{0}', space=vmem, size = 0x800, scoped, tag = 'input window, operand 4, single buffered']
    #allocation11 [shape = 'u8[131072]{0}', space=vmem, size = 0x20000, scoped, tag = 'input window, operand 5, single buffered']
    #allocation12 [shape = 's32[1]{0}', space=sflag, size = 0x4, scoped, tag = 'scoped memory for tpu_custom_call.1']
    #allocation13 [shape = 'u8[32768]{0}', space=vmem, size = 0x8000, scoped, tag = 'output window, operand 0']
    %11 = vsyncpa [#allocation3], 0
    %s12 = scalar_lea.sflag [#allocation3], 1
    %13 = vsyncpa %s12, 0
    %14 = vsyncpa [#allocation6], 0
    %15 = vsyncpa [#allocation9], 0
    %16 = vsyncpa [#allocation12], 0
    %17 = vsyncpa [#allocation4], 0
    %s18 = scalar_lea.sflag [#allocation4], 1
    %19 = vsyncpa %s18, 0
    loop: start=0, step=1, limit=4
    $region2: #{tpu_custom_call.1} parent=1 // loop_pre_header
      _
    $region3: #{tpu_custom_call.1} parent=1 // loop_header
      %s21 = sphi 0, %s25
      %p22 = scmp.ge.s32.totalorder %s21, 4
      %s31 = sphi 0, %s33
      %s34 = sphi 0, %s31
      %s35 = sphi 0, %s34
      %s51 = sphi 0, %s35
      %s55 = sphi 0, %s55
      %s57 = sphi 0, %s55
      %s58 = sphi 0, %s57
      %s72 = sphi 0, %s58
      %s76 = sphi 0, %s76
      %s78 = sphi 0, %s76
      %s79 = sphi 0, %s78
      %s93 = sphi 0, %s79
      %s97 = sphi 0, %s97
      %s99 = sphi 0, %s97
      %s100 = sphi 0, %s99
      %s114 = sphi 0, %s100
      %s118 = sphi 0, %s118
      %s120 = sphi 0, %s118
      %s121 = sphi 0, %s120
      %s135 = sphi 0, %s121
      %s139 = sphi 0, %s139
      %s141 = sphi 0, %s139
      %s142 = sphi 0, %s141
      %s156 = sphi 0, %s142
      %s162 = sphi 0, %s164
      %s165 = sphi 0, %s162
      %s166 = sphi 0, %s165
      %s182 = sphi 0, %s166
    $region4: #{tpu_custom_call.1} parent=1 // loop_header_branch
      %24 = sbr.rel (%p22) target = $region8
    $region5: #{tpu_custom_call.1} parent=1 // loop_body
      %s26 = ssub.s32 %s21, 1
      %s27 = ssub.s32 %s21, 2
      %s28 = sadd.s32 %s21, 1
      %s29 = ssub.s32 %s21, %s28
      %p30 = scmp.eq.s32.totalorder %s29, 0
      %s32 = sadd.s32 %s31, 1
      %s33 = scalar_select %p30, %s31, %s32
      %p36 = pneg %p30
      %p37 = scmp.eq.s32.totalorder %s21, 1
      %p38 = por %p36, %p37
      %p39 = scmp.ne.s32.totalorder %s31, %s34
      %p40 = scmp.eq.s32.totalorder %s21, 0
      %p41 = por %p39, %p40
      %p42 = scmp.ne.s32.totalorder %s31, %s34
      %p43 = scmp.eq.s32.totalorder %s26, 1
      %p44 = por %p42, %p43
      %p45 = scmp.ne.s32.totalorder %s34, %s35
      %p46 = scmp.eq.s32.totalorder %s26, 0
      %p47 = por %p45, %p46
      %p48 = scmp.ne.s32.totalorder %s34, %s35
      %p49 = scmp.eq.s32.totalorder %s27, 1
      %p50 = por %p48, %p49
      %p52 = scmp.ne.s32.totalorder %s35, %s51
      %p53 = scmp.eq.s32.totalorder %s27, 0
      %p54 = por %p52, %p53
      %s56 = sadd.s32 %s55, 1
      %p59 = scmp.eq.s32.totalorder %s21, 1
      %p60 = scmp.ne.s32.totalorder %s55, %s57
      %p61 = scmp.eq.s32.totalorder %s21, 0
      %p62 = por %p60, %p61
      %p63 = scmp.ne.s32.totalorder %s55, %s57
      %p64 = scmp.eq.s32.totalorder %s26, 1
      %p65 = por %p63, %p64
      %p66 = scmp.ne.s32.totalorder %s57, %s58
      %p67 = scmp.eq.s32.totalorder %s26, 0
      %p68 = por %p66, %p67
      %p69 = scmp.ne.s32.totalorder %s57, %s58
      %p70 = scmp.eq.s32.totalorder %s27, 1
      %p71 = por %p69, %p70
      %p73 = scmp.ne.s32.totalorder %s58, %s72
      %p74 = scmp.eq.s32.totalorder %s27, 0
      %p75 = por %p73, %p74
      %s77 = sadd.s32 %s76, 1
      %p80 = scmp.eq.s32.totalorder %s21, 1
      %p81 = scmp.ne.s32.totalorder %s76, %s78
      %p82 = scmp.eq.s32.totalorder %s21, 0
      %p83 = por %p81, %p82
      %p84 = scmp.ne.s32.totalorder %s76, %s78
      %p85 = scmp.eq.s32.totalorder %s26, 1
      %p86 = por %p84, %p85
      %p87 = scmp.ne.s32.totalorder %s78, %s79
      %p88 = scmp.eq.s32.totalorder %s26, 0
      %p89 = por %p87, %p88
      %p90 = scmp.ne.s32.totalorder %s78, %s79
      %p91 = scmp.eq.s32.totalorder %s27, 1
      %p92 = por %p90, %p91
      %p94 = scmp.ne.s32.totalorder %s79, %s93
      %p95 = scmp.eq.s32.totalorder %s27, 0
      %p96 = por %p94, %p95
      %s98 = sadd.s32 %s97, 1
      %p101 = scmp.eq.s32.totalorder %s21, 1
      %p102 = scmp.ne.s32.totalorder %s97, %s99
      %p103 = scmp.eq.s32.totalorder %s21, 0
      %p104 = por %p102, %p103
      %p105 = scmp.ne.s32.totalorder %s97, %s99
      %p106 = scmp.eq.s32.totalorder %s26, 1
      %p107 = por %p105, %p106
      %p108 = scmp.ne.s32.totalorder %s99, %s100
      %p109 = scmp.eq.s32.totalorder %s26, 0
      %p110 = por %p108, %p109
      %p111 = scmp.ne.s32.totalorder %s99, %s100
      %p112 = scmp.eq.s32.totalorder %s27, 1
      %p113 = por %p111, %p112
      %p115 = scmp.ne.s32.totalorder %s100, %s114
      %p116 = scmp.eq.s32.totalorder %s27, 0
      %p117 = por %p115, %p116
      %s119 = sadd.s32 %s118, 1
      %p122 = scmp.eq.s32.totalorder %s21, 1
      %p123 = scmp.ne.s32.totalorder %s118, %s120
      %p124 = scmp.eq.s32.totalorder %s21, 0
      %p125 = por %p123, %p124
      %p126 = scmp.ne.s32.totalorder %s118, %s120
      %p127 = scmp.eq.s32.totalorder %s26, 1
      %p128 = por %p126, %p127
      %p129 = scmp.ne.s32.totalorder %s120, %s121
      %p130 = scmp.eq.s32.totalorder %s26, 0
      %p131 = por %p129, %p130
      %p132 = scmp.ne.s32.totalorder %s120, %s121
      %p133 = scmp.eq.s32.totalorder %s27, 1
      %p134 = por %p132, %p133
      %p136 = scmp.ne.s32.totalorder %s121, %s135
      %p137 = scmp.eq.s32.totalorder %s27, 0
      %p138 = por %p136, %p137
      %s140 = sadd.s32 %s139, 1
      %p143 = scmp.eq.s32.totalorder %s21, 1
      %p144 = scmp.ne.s32.totalorder %s139, %s141
      %p145 = scmp.eq.s32.totalorder %s21, 0
      %p146 = por %p144, %p145
      %p147 = scmp.ne.s32.totalorder %s139, %s141
      %p148 = scmp.eq.s32.totalorder %s26, 1
      %p149 = por %p147, %p148
      %p150 = scmp.ne.s32.totalorder %s141, %s142
      %p151 = scmp.eq.s32.totalorder %s26, 0
      %p152 = por %p150, %p151
      %p153 = scmp.ne.s32.totalorder %s141, %s142
      %p154 = scmp.eq.s32.totalorder %s27, 1
      %p155 = por %p153, %p154
      %p157 = scmp.ne.s32.totalorder %s142, %s156
      %p158 = scmp.eq.s32.totalorder %s27, 0
      %p159 = por %p157, %p158
      %s160 = ssub.s32 %s21, %s28
      %p161 = scmp.eq.s32.totalorder %s160, 0
      %s163 = sadd.s32 %s162, 1
      %s164 = scalar_select %p161, %s162, %s163
      %p167 = pneg %p161
      %p168 = scmp.eq.s32.totalorder %s21, 1
      %p169 = por %p167, %p168
      %p170 = scmp.ne.s32.totalorder %s162, %s165
      %p171 = scmp.eq.s32.totalorder %s21, 0
      %p172 = por %p170, %p171
      %p173 = scmp.ne.s32.totalorder %s162, %s165
      %p174 = scmp.eq.s32.totalorder %s26, 1
      %p175 = por %p173, %p174
      %p176 = scmp.ne.s32.totalorder %s165, %s166
      %p177 = scmp.eq.s32.totalorder %s26, 0
      %p178 = por %p176, %p177
      %p179 = scmp.ne.s32.totalorder %s165, %s166
      %p180 = scmp.eq.s32.totalorder %s27, 1
      %p181 = por %p179, %p180
      %p183 = scmp.ne.s32.totalorder %s166, %s182
      %p184 = scmp.eq.s32.totalorder %s27, 0
      %p185 = por %p183, %p184
      %p186 = scmp.le.s32.totalorder 1, %s21
      %p187 = scmp.lt.s32.totalorder %s21, 3
      %p188 = pnand %p186, %p187
      %p189 = pneg %p188
      // Predicated region
      $region9: #{tpu_custom_call.1} parent=5 // pred_check
        _
      $region10: #{tpu_custom_call.1} parent=5 // pred_check_branch
        %191 = sbr.rel (%p188) target = $region12
      $region11: #{tpu_custom_call.1} parent=5 // pred_region
        %s192 = ssub.s32 %s21, 1
        // Predicated region
        $region13: #{tpu_custom_call.1} parent=11 // pred_check
          %p193 = pneg %p68
        $region14: #{tpu_custom_call.1} parent=11 // pred_check_branch
          %195 = sbr.rel (%p193) target = $region16
        $region15: #{tpu_custom_call.1} parent=11 // pred_region
          %197 = vsyncadd [#allocation6], 0
          %s198 = sshll.u32 %s1, 4
          %s199 = int_to_ptr.hbm [resolvable:$true] %s198
          %s200 = sshll.u32 [#allocation5], 4
          %s201 = int_to_ptr.vmem [resolvable:$true] %s200
          %206 = dma.hbm_to_vmem [thread:$0]  %s199, 8192, %s201, [#allocation6], 256, 256, 16
        $region16: #{tpu_custom_call.1} parent=11 // pred_fallthru
          _
        // Predicated region
        $region17: #{tpu_custom_call.1} parent=11 // pred_check
          %p207 = pneg %p89
        $region18: #{tpu_custom_call.1} parent=11 // pred_check_branch
          %209 = sbr.rel (%p207) target = $region20
        $region19: #{tpu_custom_call.1} parent=11 // pred_region
          %211 = vsyncadd [#allocation6], 0
          %s213 = sshll.u32 %s2, 4
          %s214 = int_to_ptr.hbm [resolvable:$true] %s213
          %s215 = sshll.u32 [#allocation7], 4
          %s216 = int_to_ptr.vmem [resolvable:$true] %s215
          %218 = dma.hbm_to_vmem [thread:$0]  %s214, 64, %s216, [#allocation6]
        $region20: #{tpu_custom_call.1} parent=11 // pred_fallthru
          _
        // Predicated region
        $region21: #{tpu_custom_call.1} parent=11 // pred_check
          %p219 = pneg %p110
        $region22: #{tpu_custom_call.1} parent=11 // pred_check_branch
          %221 = sbr.rel (%p219) target = $region24
        $region23: #{tpu_custom_call.1} parent=11 // pred_region
          %223 = vsyncadd [#allocation9], 0
          %s224 = sshll.u32 %s3, 4
          %s225 = int_to_ptr.hbm [resolvable:$true] %s224
          %s226 = sshll.u32 [#allocation8], 4
          %s227 = int_to_ptr.vmem [resolvable:$true] %s226
          %232 = dma.hbm_to_vmem [thread:$0]  %s225, 16384, %s227, [#allocation9], 256, 256, 16
        $region24: #{tpu_custom_call.1} parent=11 // pred_fallthru
          _
        // Predicated region
        $region25: #{tpu_custom_call.1} parent=11 // pred_check
          %p233 = pneg %p131
        $region26: #{tpu_custom_call.1} parent=11 // pred_check_branch
          %235 = sbr.rel (%p233) target = $region28
        $region27: #{tpu_custom_call.1} parent=11 // pred_region
          %237 = vsyncadd [#allocation9], 0
          %s239 = sshll.u32 %s4, 4
          %s240 = int_to_ptr.hbm [resolvable:$true] %s239
          %s241 = sshll.u32 [#allocation10], 4
          %s242 = int_to_ptr.vmem [resolvable:$true] %s241
          %244 = dma.hbm_to_vmem [thread:$0]  %s240, 64, %s242, [#allocation9]
        $region28: #{tpu_custom_call.1} parent=11 // pred_fallthru
          _
        // Predicated region
        $region29: #{tpu_custom_call.1} parent=11 // pred_check
          %p245 = pneg %p152
        $region30: #{tpu_custom_call.1} parent=11 // pred_check_branch
          %247 = sbr.rel (%p245) target = $region32
        $region31: #{tpu_custom_call.1} parent=11 // pred_region
          %249 = vsyncadd [#allocation12], 0
          %s250 = sshll.u32 %s5, 4
          %s251 = int_to_ptr.hbm [resolvable:$true] %s250
          %s252 = sshll.u32 [#allocation11], 4
          %s253 = int_to_ptr.vmem [resolvable:$true] %s252
          %258 = dma.hbm_to_vmem [thread:$0]  %s251, 4096, %s253, [#allocation12], 64, 64, 4
        $region32: #{tpu_custom_call.1} parent=11 // pred_fallthru
          _
      $region12: #{tpu_custom_call.1} parent=5 // pred_fallthru
        _
      %p259 = scmp.lt.s32.totalorder %s21, 2
      // Predicated region
      $region33: #{tpu_custom_call.1} parent=5 // pred_check
        %p260 = pneg %p259
      $region34: #{tpu_custom_call.1} parent=5 // pred_check_branch
        %262 = sbr.rel (%p260) target = $region36
      $region35: #{tpu_custom_call.1} parent=5 // pred_region
        // Predicated region
        $region37: #{tpu_custom_call.1} parent=35 // pred_check
          %p263 = pneg %p41
        $region38: #{tpu_custom_call.1} parent=35 // pred_check_branch
          %265 = sbr.rel (%p263) target = $region40
        $region39: #{tpu_custom_call.1} parent=35 // pred_region
          %s266 = sand.u32 %s31, 1
          %s267 = scalar_lea.sflag [#allocation3], %s266
          %s268 = sand.u32 %s31, 1
          %s269 = smul.addr %s268, 64
          %s270 = scalar_lea.vmem [#allocation2], %s269
          %s271 = smul.u32 4, %s21
          %273 = vsyncadd %s267, 0
          %s274 = smul.addr %s271, 2
          %s275 = smul.addr %s274, 8
          %s276 = scalar_lea.hbm %s0, %s275
          %s277 = sshll.u32 %s276, 4
          %s278 = int_to_ptr.hbm [resolvable:$true] %s277
          %s279 = sshll.u32 %s270, 4
          %s280 = int_to_ptr.vmem [resolvable:$true] %s279
          %285 = dma.hbm_to_vmem [thread:$0]  %s278, 1024, %s280, %s267, 256, 256, 16
        $region40: #{tpu_custom_call.1} parent=35 // pred_fallthru
          _
      $region36: #{tpu_custom_call.1} parent=5 // pred_fallthru
        _
      %p286 = scmp.le.s32.totalorder 1, %s21
      %p287 = scmp.lt.s32.totalorder %s21, 3
      %p288 = pnand %p286, %p287
      %p289 = pneg %p288
      // Predicated region
      $region41: #{tpu_custom_call.1} parent=5 // pred_check
        _
      $region42: #{tpu_custom_call.1} parent=5 // pred_check_branch
        %291 = sbr.rel (%p288) target = $region44
      $region43: #{tpu_custom_call.1} parent=5 // pred_region
        %s292 = ssub.s32 %s21, 1
        %s293 = sand.u32 %s34, 1
        %s294 = scalar_lea.sflag [#allocation3], %s293
        %s295 = sand.u32 %s34, 1
        %s296 = smul.addr %s295, 64
        %s297 = scalar_lea.vmem [#allocation2], %s296
        // Predicated region
        $region45: #{tpu_custom_call.1} parent=43 // pred_check
          %p298 = pneg %p47
        $region46: #{tpu_custom_call.1} parent=43 // pred_check_branch
          %300 = sbr.rel (%p298) target = $region48
        $region47: #{tpu_custom_call.1} parent=43 // pred_region
          %302 = dma.done %s294, 1024
        $region48: #{tpu_custom_call.1} parent=43 // pred_fallthru
          _
        // Predicated region
        $region49: #{tpu_custom_call.1} parent=43 // pred_check
          %p303 = pneg %p68
        $region50: #{tpu_custom_call.1} parent=43 // pred_check_branch
          %305 = sbr.rel (%p303) target = $region52
        $region51: #{tpu_custom_call.1} parent=43 // pred_region
          %307 = dma.done [#allocation6], 8192
        $region52: #{tpu_custom_call.1} parent=43 // pred_fallthru
          _
        // Predicated region
        $region53: #{tpu_custom_call.1} parent=43 // pred_check
          %p308 = pneg %p89
        $region54: #{tpu_custom_call.1} parent=43 // pred_check_branch
          %310 = sbr.rel (%p308) target = $region56
        $region55: #{tpu_custom_call.1} parent=43 // pred_region
          %312 = dma.done [#allocation6], 64
        $region56: #{tpu_custom_call.1} parent=43 // pred_fallthru
          _
        // Predicated region
        $region57: #{tpu_custom_call.1} parent=43 // pred_check
          %p313 = pneg %p110
        $region58: #{tpu_custom_call.1} parent=43 // pred_check_branch
          %315 = sbr.rel (%p313) target = $region60
        $region59: #{tpu_custom_call.1} parent=43 // pred_region
          %317 = dma.done [#allocation9], 16384
        $region60: #{tpu_custom_call.1} parent=43 // pred_fallthru
          _
        // Predicated region
        $region61: #{tpu_custom_call.1} parent=43 // pred_check
          %p318 = pneg %p131
        $region62: #{tpu_custom_call.1} parent=43 // pred_check_branch
          %320 = sbr.rel (%p318) target = $region64
        $region63: #{tpu_custom_call.1} parent=43 // pred_region
          %322 = dma.done [#allocation9], 64
        $region64: #{tpu_custom_call.1} parent=43 // pred_fallthru
          _
        // Predicated region
        $region65: #{tpu_custom_call.1} parent=43 // pred_check
          %p323 = pneg %p152
        $region66: #{tpu_custom_call.1} parent=43 // pred_check_branch
          %325 = sbr.rel (%p323) target = $region68
        $region67: #{tpu_custom_call.1} parent=43 // pred_region
          %327 = dma.done [#allocation12], 4096
        $region68: #{tpu_custom_call.1} parent=43 // pred_fallthru
          _
        %s328 = sand.u32 %s34, 1
        %s329 = scalar_lea.sflag [#allocation3], %s328
        %s330 = sand.u32 %s34, 1
        %s331 = smul.addr %s330, 64
        %s332 = scalar_lea.vmem [#allocation2], %s331
        %p333 = pneg %p47
        %p334 = pneg %p44
        %p335 = pneg %p68
        %p336 = pneg %p65
        %p337 = pneg %p89
        %p338 = pneg %p86
        %p339 = pneg %p110
        %p340 = pneg %p107
        %p341 = pneg %p131
        %p342 = pneg %p128
        %p343 = pneg %p152
        %p344 = pneg %p149
        %p345 = pneg %p178
        %p346 = pneg %p175
        %s347 = sand.u32 %s165, 1
        %s348 = scalar_lea.sflag [#allocation4], %s347
        %s349 = sand.u32 %s165, 1
        %s350 = smul.addr %s349, 32
        %s351 = scalar_lea.vmem [#allocation13], %s350
        %s352 = smul.u32 4, %s26
        %s353 = smul.u32 4, %s26
        %v354 = vld [vmem:[%s297] sm:$0xff]
        %v355 = vld [vmem:[%s297 + $0x8] sm:$0xff]
        %v356 = vld [vmem:[%s297 + $0x10] sm:$0xff]
        %v357 = vld [vmem:[%s297 + $0x18] sm:$0xff]
        %v358 = vld [vmem:[%s297 + $0x20] sm:$0xff]
        %v359 = vld [vmem:[%s297 + $0x28] sm:$0xff]
        %v360 = vld [vmem:[%s297 + $0x30] sm:$0xff]
        %v361 = vld [vmem:[%s297 + $0x38] sm:$0xff]
        %v362 = vpack.c.bf16 %v356, %v354
        %v363 = vpack.c.bf16 %v357, %v355
        %v364 = vpack.c.bf16 %v360, %v358
        %v365 = vpack.c.bf16 %v361, %v359
        %v366 = vld [vmem:[#allocation5] sm:$0xff]
        %v367 = vld [vmem:[#allocation5 + $0x8] sm:$0xff]
        %v368 = vld [vmem:[#allocation5 + $0x10] sm:$0xff]
        %v369 = vld [vmem:[#allocation5 + $0x18] sm:$0xff]
        %v370 = vld [vmem:[#allocation5 + $0x20] sm:$0xff]
        %v371 = vld [vmem:[#allocation5 + $0x28] sm:$0xff]
        %v372 = vld [vmem:[#allocation5 + $0x30] sm:$0xff]
        %v373 = vld [vmem:[#allocation5 + $0x38] sm:$0xff]
        %v374 = vld [vmem:[#allocation5 + $0x40] sm:$0xff]
        %v375 = vld [vmem:[#allocation5 + $0x48] sm:$0xff]
        %v376 = vld [vmem:[#allocation5 + $0x50] sm:$0xff]
        %v377 = vld [vmem:[#allocation5 + $0x58] sm:$0xff]
        %v378 = vld [vmem:[#allocation5 + $0x60] sm:$0xff]
        %v379 = vld [vmem:[#allocation5 + $0x68] sm:$0xff]
        %v380 = vld [vmem:[#allocation5 + $0x70] sm:$0xff]
        %v381 = vld [vmem:[#allocation5 + $0x78] sm:$0xff]
        %v382 = vld [vmem:[#allocation5 + $0x80] sm:$0xff]
        %v383 = vld [vmem:[#allocation5 + $0x88] sm:$0xff]
        %v384 = vld [vmem:[#allocation5 + $0x90] sm:$0xff]
        %v385 = vld [vmem:[#allocation5 + $0x98] sm:$0xff]
        %v386 = vld [vmem:[#allocation5 + $0xa0] sm:$0xff]
        %v387 = vld [vmem:[#allocation5 + $0xa8] sm:$0xff]
        %v388 = vld [vmem:[#allocation5 + $0xb0] sm:$0xff]
        %v389 = vld [vmem:[#allocation5 + $0xb8] sm:$0xff]
        %v390 = vld [vmem:[#allocation5 + $0xc0] sm:$0xff]
        %v391 = vld [vmem:[#allocation5 + $0xc8] sm:$0xff]
        %v392 = vld [vmem:[#allocation5 + $0xd0] sm:$0xff]
        %v393 = vld [vmem:[#allocation5 + $0xd8] sm:$0xff]
        %v394 = vld [vmem:[#allocation5 + $0xe0] sm:$0xff]
        %v395 = vld [vmem:[#allocation5 + $0xe8] sm:$0xff]
        %v396 = vld [vmem:[#allocation5 + $0xf0] sm:$0xff]
        %v397 = vld [vmem:[#allocation5 + $0xf8] sm:$0xff]
        %v398 = vld [vmem:[#allocation5 + $0x100] sm:$0xff]
        %v399 = vld [vmem:[#allocation5 + $0x108] sm:$0xff]
        %v400 = vld [vmem:[#allocation5 + $0x110] sm:$0xff]
        %v401 = vld [vmem:[#allocation5 + $0x118] sm:$0xff]
        %v402 = vld [vmem:[#allocation5 + $0x120] sm:$0xff]
        %v403 = vld [vmem:[#allocation5 + $0x128] sm:$0xff]
        %v404 = vld [vmem:[#allocation5 + $0x130] sm:$0xff]
        %v405 = vld [vmem:[#allocation5 + $0x138] sm:$0xff]
        %v406 = vld [vmem:[#allocation5 + $0x140] sm:$0xff]
        %v407 = vld [vmem:[#allocation5 + $0x148] sm:$0xff]
        %v408 = vld [vmem:[#allocation5 + $0x150] sm:$0xff]
        %v409 = vld [vmem:[#allocation5 + $0x158] sm:$0xff]
        %v410 = vld [vmem:[#allocation5 + $0x160] sm:$0xff]
        %v411 = vld [vmem:[#allocation5 + $0x168] sm:$0xff]
        %v412 = vld [vmem:[#allocation5 + $0x170] sm:$0xff]
        %v413 = vld [vmem:[#allocation5 + $0x178] sm:$0xff]
        %v414 = vld [vmem:[#allocation5 + $0x180] sm:$0xff]
        %v415 = vld [vmem:[#allocation5 + $0x188] sm:$0xff]
        %v416 = vld [vmem:[#allocation5 + $0x190] sm:$0xff]
        %v417 = vld [vmem:[#allocation5 + $0x198] sm:$0xff]
        %v418 = vld [vmem:[#allocation5 + $0x1a0] sm:$0xff]
        %v419 = vld [vmem:[#allocation5 + $0x1a8] sm:$0xff]
        %v420 = vld [vmem:[#allocation5 + $0x1b0] sm:$0xff]
        %v421 = vld [vmem:[#allocation5 + $0x1b8] sm:$0xff]
        %v422 = vld [vmem:[#allocation5 + $0x1c0] sm:$0xff]
        %v423 = vld [vmem:[#allocation5 + $0x1c8] sm:$0xff]
        %v424 = vld [vmem:[#allocation5 + $0x1d0] sm:$0xff]
        %v425 = vld [vmem:[#allocation5 + $0x1d8] sm:$0xff]
        %v426 = vld [vmem:[#allocation5 + $0x1e0] sm:$0xff]
        %v427 = vld [vmem:[#allocation5 + $0x1e8] sm:$0xff]
        %v428 = vld [vmem:[#allocation5 + $0x1f0] sm:$0xff]
        %v429 = vld [vmem:[#allocation5 + $0x1f8] sm:$0xff]
        %v430 = vld [vmem:[#allocation7] sm:$0xf]
        %v432 = vperm.slane %v430, 0
        %v433 = vperm.slane %v430, 1
        %v434 = vperm.slane %v430, 2
        %v435 = vperm.slane %v430, 3
        %v504 = vunpack.c.l.b16 %v366
        %v505 = vunpack.c.h.b16 %v366
        %v506 = vunpack.c.l.b16 %v367
        %v507 = vunpack.c.h.b16 %v367
        %v508 = vunpack.c.l.b16 %v368
        %v509 = vunpack.c.h.b16 %v368
        %v510 = vunpack.c.l.b16 %v369
        %v511 = vunpack.c.h.b16 %v369
        %v512 = vunpack.c.l.b16 %v370
        %v513 = vunpack.c.h.b16 %v370
        %v514 = vunpack.c.l.b16 %v371
        %v515 = vunpack.c.h.b16 %v371
        %v516 = vunpack.c.l.b16 %v372
        %v517 = vunpack.c.h.b16 %v372
        %v518 = vunpack.c.l.b16 %v373
        %v519 = vunpack.c.h.b16 %v373
        %v520 = vunpack.c.l.b16 %v374
        %v521 = vunpack.c.h.b16 %v374
        %v522 = vunpack.c.l.b16 %v375
        %v523 = vunpack.c.h.b16 %v375
        %v524 = vunpack.c.l.b16 %v376
        %v525 = vunpack.c.h.b16 %v376
        %v526 = vunpack.c.l.b16 %v377
        %v527 = vunpack.c.h.b16 %v377
        %v528 = vunpack.c.l.b16 %v378
        %v529 = vunpack.c.h.b16 %v378
        %v530 = vunpack.c.l.b16 %v379
        %v531 = vunpack.c.h.b16 %v379
        %v532 = vunpack.c.l.b16 %v380
        %v533 = vunpack.c.h.b16 %v380
        %v534 = vunpack.c.l.b16 %v381
        %v535 = vunpack.c.h.b16 %v381
        %v536 = vunpack.c.l.b16 %v382
        %v537 = vunpack.c.h.b16 %v382
        %v538 = vunpack.c.l.b16 %v383
        %v539 = vunpack.c.h.b16 %v383
        %v540 = vunpack.c.l.b16 %v384
        %v541 = vunpack.c.h.b16 %v384
        %v542 = vunpack.c.l.b16 %v385
        %v543 = vunpack.c.h.b16 %v385
        %v544 = vunpack.c.l.b16 %v386
        %v545 = vunpack.c.h.b16 %v386
        %v546 = vunpack.c.l.b16 %v387
        %v547 = vunpack.c.h.b16 %v387
        %v548 = vunpack.c.l.b16 %v388
        %v549 = vunpack.c.h.b16 %v388
        %v550 = vunpack.c.l.b16 %v389
        %v551 = vunpack.c.h.b16 %v389
        %v552 = vunpack.c.l.b16 %v390
        %v553 = vunpack.c.h.b16 %v390
        %v554 = vunpack.c.l.b16 %v391
        %v555 = vunpack.c.h.b16 %v391
        %v556 = vunpack.c.l.b16 %v392
        %v557 = vunpack.c.h.b16 %v392
        %v558 = vunpack.c.l.b16 %v393
        %v559 = vunpack.c.h.b16 %v393
        %v560 = vunpack.c.l.b16 %v394
        %v561 = vunpack.c.h.b16 %v394
        %v562 = vunpack.c.l.b16 %v395
        %v563 = vunpack.c.h.b16 %v395
        %v564 = vunpack.c.l.b16 %v396
        %v565 = vunpack.c.h.b16 %v396
        %v566 = vunpack.c.l.b16 %v397
        %v567 = vunpack.c.h.b16 %v397
        %v568 = vunpack.c.l.b16 %v398
        %v569 = vunpack.c.h.b16 %v398
        %v570 = vunpack.c.l.b16 %v399
        %v571 = vunpack.c.h.b16 %v399
        %v572 = vunpack.c.l.b16 %v400
        %v573 = vunpack.c.h.b16 %v400
        %v574 = vunpack.c.l.b16 %v401
        %v575 = vunpack.c.h.b16 %v401
        %v576 = vunpack.c.l.b16 %v402
        %v577 = vunpack.c.h.b16 %v402
        %v578 = vunpack.c.l.b16 %v403
        %v579 = vunpack.c.h.b16 %v403
        %v580 = vunpack.c.l.b16 %v404
        %v581 = vunpack.c.h.b16 %v404
        %v582 = vunpack.c.l.b16 %v405
        %v583 = vunpack.c.h.b16 %v405
        %v584 = vunpack.c.l.b16 %v406
        %v585 = vunpack.c.h.b16 %v406
        %v586 = vunpack.c.l.b16 %v407
        %v587 = vunpack.c.h.b16 %v407
        %v588 = vunpack.c.l.b16 %v408
        %v589 = vunpack.c.h.b16 %v408
        %v590 = vunpack.c.l.b16 %v409
        %v591 = vunpack.c.h.b16 %v409
        %v592 = vunpack.c.l.b16 %v410
        %v593 = vunpack.c.h.b16 %v410
        %v594 = vunpack.c.l.b16 %v411
        %v595 = vunpack.c.h.b16 %v411
        %v596 = vunpack.c.l.b16 %v412
        %v597 = vunpack.c.h.b16 %v412
        %v598 = vunpack.c.l.b16 %v413
        %v599 = vunpack.c.h.b16 %v413
        %v600 = vunpack.c.l.b16 %v414
        %v601 = vunpack.c.h.b16 %v414
        %v602 = vunpack.c.l.b16 %v415
        %v603 = vunpack.c.h.b16 %v415
        %v604 = vunpack.c.l.b16 %v416
        %v605 = vunpack.c.h.b16 %v416
        %v606 = vunpack.c.l.b16 %v417
        %v607 = vunpack.c.h.b16 %v417
        %v608 = vunpack.c.l.b16 %v418
        %v609 = vunpack.c.h.b16 %v418
        %v610 = vunpack.c.l.b16 %v419
        %v611 = vunpack.c.h.b16 %v419
        %v612 = vunpack.c.l.b16 %v420
        %v613 = vunpack.c.h.b16 %v420
        %v614 = vunpack.c.l.b16 %v421
        %v615 = vunpack.c.h.b16 %v421
        %v616 = vunpack.c.l.b16 %v422
        %v617 = vunpack.c.h.b16 %v422
        %v618 = vunpack.c.l.b16 %v423
        %v619 = vunpack.c.h.b16 %v423
        %v620 = vunpack.c.l.b16 %v424
        %v621 = vunpack.c.h.b16 %v424
        %v622 = vunpack.c.l.b16 %v425
        %v623 = vunpack.c.h.b16 %v425
        %v624 = vunpack.c.l.b16 %v426
        %v625 = vunpack.c.h.b16 %v426
        %v626 = vunpack.c.l.b16 %v427
        %v627 = vunpack.c.h.b16 %v427
        %v628 = vunpack.c.l.b16 %v428
        %v629 = vunpack.c.h.b16 %v428
        %v630 = vunpack.c.l.b16 %v429
        %v631 = vunpack.c.h.b16 %v429
        %v632 = vpack.c.b16 %v508, %v504
        %v633 = vpack.c.b16 %v509, %v505
        %v634 = vpack.c.b16 %v510, %v506
        %v635 = vpack.c.b16 %v511, %v507
        %v636 = vpack.c.b16 %v516, %v512
        %v637 = vpack.c.b16 %v517, %v513
        %v638 = vpack.c.b16 %v518, %v514
        %v639 = vpack.c.b16 %v519, %v515
        %v640 = vpack.c.b16 %v524, %v520
        %v641 = vpack.c.b16 %v525, %v521
        %v642 = vpack.c.b16 %v526, %v522
        %v643 = vpack.c.b16 %v527, %v523
        %v644 = vpack.c.b16 %v532, %v528
        %v645 = vpack.c.b16 %v533, %v529
        %v646 = vpack.c.b16 %v534, %v530
        %v647 = vpack.c.b16 %v535, %v531
        %v648 = vpack.c.b16 %v540, %v536
        %v649 = vpack.c.b16 %v541, %v537
        %v650 = vpack.c.b16 %v542, %v538
        %v651 = vpack.c.b16 %v543, %v539
        %v652 = vpack.c.b16 %v548, %v544
        %v653 = vpack.c.b16 %v549, %v545
        %v654 = vpack.c.b16 %v550, %v546
        %v655 = vpack.c.b16 %v551, %v547
        %v656 = vpack.c.b16 %v556, %v552
        %v657 = vpack.c.b16 %v557, %v553
        %v658 = vpack.c.b16 %v558, %v554
        %v659 = vpack.c.b16 %v559, %v555
        %v660 = vpack.c.b16 %v564, %v560
        %v661 = vpack.c.b16 %v565, %v561
        %v662 = vpack.c.b16 %v566, %v562
        %v663 = vpack.c.b16 %v567, %v563
        %v664 = vpack.c.b16 %v572, %v568
        %v665 = vpack.c.b16 %v573, %v569
        %v666 = vpack.c.b16 %v574, %v570
        %v667 = vpack.c.b16 %v575, %v571
        %v668 = vpack.c.b16 %v580, %v576
        %v669 = vpack.c.b16 %v581, %v577
        %v670 = vpack.c.b16 %v582, %v578
        %v671 = vpack.c.b16 %v583, %v579
        %v672 = vpack.c.b16 %v588, %v584
        %v673 = vpack.c.b16 %v589, %v585
        %v674 = vpack.c.b16 %v590, %v586
        %v675 = vpack.c.b16 %v591, %v587
        %v676 = vpack.c.b16 %v596, %v592
        %v677 = vpack.c.b16 %v597, %v593
        %v678 = vpack.c.b16 %v598, %v594
        %v679 = vpack.c.b16 %v599, %v595
        %v680 = vpack.c.b16 %v604, %v600
        %v681 = vpack.c.b16 %v605, %v601
        %v682 = vpack.c.b16 %v606, %v602
        %v683 = vpack.c.b16 %v607, %v603
        %v684 = vpack.c.b16 %v612, %v608
        %v685 = vpack.c.b16 %v613, %v609
        %v686 = vpack.c.b16 %v614, %v610
        %v687 = vpack.c.b16 %v615, %v611
        %v688 = vpack.c.b16 %v620, %v616
        %v689 = vpack.c.b16 %v621, %v617
        %v690 = vpack.c.b16 %v622, %v618
        %v691 = vpack.c.b16 %v623, %v619
        %v692 = vpack.c.b16 %v628, %v624
        %v693 = vpack.c.b16 %v629, %v625
        %v694 = vpack.c.b16 %v630, %v626
        %v695 = vpack.c.b16 %v631, %v627
        %760 = vmatpush.bf16.msra.mxu0 %v660
        %761 = vmatpush.bf16.msra.mxu0 %v656
        %762 = vmatpush.bf16.msra.mxu0 %v652
        %763 = vmatpush.bf16.msra.mxu0 %v648
        %764 = vmatpush.bf16.msra.mxu0 %v644
        %765 = vmatpush.bf16.msra.mxu0 %v640
        %766 = vmatpush.bf16.msra.mxu0 %v636
        %767 = vmatpush.bf16.msra.mxu0 %v632
        %768 = vmatmul.bf16.gmra.mxu0 %v362
        %v769 = vpop.f32.mrf.mxu0
        %v770 = vadd.f32 %v432, %v769
        %v771 = vpop.f32.mrf.mxu0
        %v772 = vadd.f32 %v432, %v771
        %773 = vmatmul.bf16.gmra.mxu0 %v364
        %v774 = vpop.f32.mrf.mxu0
        %v775 = vadd.f32 %v432, %v774
        %v776 = vpop.f32.mrf.mxu0
        %v777 = vadd.f32 %v432, %v776
        %778 = vdwg.mxu0
        %779 = vmatpush.bf16.msra.mxu0 %v692
        %780 = vmatpush.bf16.msra.mxu0 %v688
        %781 = vmatpush.bf16.msra.mxu0 %v684
        %782 = vmatpush.bf16.msra.mxu0 %v680
        %783 = vmatpush.bf16.msra.mxu0 %v676
        %784 = vmatpush.bf16.msra.mxu0 %v672
        %785 = vmatpush.bf16.msra.mxu0 %v668
        %786 = vmatpush.bf16.msra.mxu0 %v664
        %787 = vmatmul.bf16.gmra.mxu0 %v363
        %v788 = vpop.f32.mrf.mxu0
        %v789 = vadd.f32 %v770, %v788
        %v790 = vpop.f32.mrf.mxu0
        %v791 = vadd.f32 %v772, %v790
        %792 = vmatmul.bf16.gmra.mxu0 %v365
        %v793 = vpop.f32.mrf.mxu0
        %v794 = vadd.f32 %v775, %v793
        %v795 = vpop.f32.mrf.mxu0
        %v796 = vadd.f32 %v777, %v795
        %797 = vdwg.mxu0
        %798 = vmatpush.bf16.msra.mxu0 %v661
        %799 = vmatpush.bf16.msra.mxu0 %v657
        %800 = vmatpush.bf16.msra.mxu0 %v653
        %801 = vmatpush.bf16.msra.mxu0 %v649
        %802 = vmatpush.bf16.msra.mxu0 %v645
        %803 = vmatpush.bf16.msra.mxu0 %v641
        %804 = vmatpush.bf16.msra.mxu0 %v637
        %805 = vmatpush.bf16.msra.mxu0 %v633
        %806 = vmatmul.bf16.gmra.mxu0 %v362
        %v807 = vpop.f32.mrf.mxu0
        %v808 = vadd.f32 %v433, %v807
        %v809 = vpop.f32.mrf.mxu0
        %v810 = vadd.f32 %v433, %v809
        %811 = vmatmul.bf16.gmra.mxu0 %v364
        %v812 = vpop.f32.mrf.mxu0
        %v813 = vadd.f32 %v433, %v812
        %v814 = vpop.f32.mrf.mxu0
        %v815 = vadd.f32 %v433, %v814
        %816 = vdwg.mxu0
        %817 = vmatpush.bf16.msra.mxu0 %v693
        %818 = vmatpush.bf16.msra.mxu0 %v689
        %819 = vmatpush.bf16.msra.mxu0 %v685
        %820 = vmatpush.bf16.msra.mxu0 %v681
        %821 = vmatpush.bf16.msra.mxu0 %v677
        %822 = vmatpush.bf16.msra.mxu0 %v673
        %823 = vmatpush.bf16.msra.mxu0 %v669
        %824 = vmatpush.bf16.msra.mxu0 %v665
        %825 = vmatmul.bf16.gmra.mxu0 %v363
        %v826 = vpop.f32.mrf.mxu0
        %v827 = vadd.f32 %v808, %v826
        %v828 = vpop.f32.mrf.mxu0
        %v829 = vadd.f32 %v810, %v828
        %830 = vmatmul.bf16.gmra.mxu0 %v365
        %v831 = vpop.f32.mrf.mxu0
        %v832 = vadd.f32 %v813, %v831
        %v833 = vpop.f32.mrf.mxu0
        %v834 = vadd.f32 %v815, %v833
        %835 = vdwg.mxu0
        %836 = vmatpush.bf16.msra.mxu0 %v662
        %837 = vmatpush.bf16.msra.mxu0 %v658
        %838 = vmatpush.bf16.msra.mxu0 %v654
        %839 = vmatpush.bf16.msra.mxu0 %v650
        %840 = vmatpush.bf16.msra.mxu0 %v646
        %841 = vmatpush.bf16.msra.mxu0 %v642
        %842 = vmatpush.bf16.msra.mxu0 %v638
        %843 = vmatpush.bf16.msra.mxu0 %v634
        %844 = vmatmul.bf16.gmra.mxu0 %v362
        %v845 = vpop.f32.mrf.mxu0
        %v846 = vadd.f32 %v434, %v845
        %v847 = vpop.f32.mrf.mxu0
        %v848 = vadd.f32 %v434, %v847
        %849 = vmatmul.bf16.gmra.mxu0 %v364
        %v850 = vpop.f32.mrf.mxu0
        %v851 = vadd.f32 %v434, %v850
        %v852 = vpop.f32.mrf.mxu0
        %v853 = vadd.f32 %v434, %v852
        %854 = vdwg.mxu0
        %855 = vmatpush.bf16.msra.mxu0 %v694
        %856 = vmatpush.bf16.msra.mxu0 %v690
        %857 = vmatpush.bf16.msra.mxu0 %v686
        %858 = vmatpush.bf16.msra.mxu0 %v682
        %859 = vmatpush.bf16.msra.mxu0 %v678
        %860 = vmatpush.bf16.msra.mxu0 %v674
        %861 = vmatpush.bf16.msra.mxu0 %v670
        %862 = vmatpush.bf16.msra.mxu0 %v666
        %863 = vmatmul.bf16.gmra.mxu0 %v363
        %v864 = vpop.f32.mrf.mxu0
        %v865 = vadd.f32 %v846, %v864
        %v866 = vpop.f32.mrf.mxu0
        %v867 = vadd.f32 %v848, %v866
        %868 = vmatmul.bf16.gmra.mxu0 %v365
        %v869 = vpop.f32.mrf.mxu0
        %v870 = vadd.f32 %v851, %v869
        %v871 = vpop.f32.mrf.mxu0
        %v872 = vadd.f32 %v853, %v871
        %873 = vdwg.mxu0
        %874 = vmatpush.bf16.msra.mxu0 %v663
        %875 = vmatpush.bf16.msra.mxu0 %v659
        %876 = vmatpush.bf16.msra.mxu0 %v655
        %877 = vmatpush.bf16.msra.mxu0 %v651
        %878 = vmatpush.bf16.msra.mxu0 %v647
        %879 = vmatpush.bf16.msra.mxu0 %v643
        %880 = vmatpush.bf16.msra.mxu0 %v639
        %881 = vmatpush.bf16.msra.mxu0 %v635
        %882 = vmatmul.bf16.gmra.mxu0 %v362
        %v883 = vpop.f32.mrf.mxu0
        %v884 = vadd.f32 %v435, %v883
        %v885 = vpop.f32.mrf.mxu0
        %v886 = vadd.f32 %v435, %v885
        %887 = vmatmul.bf16.gmra.mxu0 %v364
        %v888 = vpop.f32.mrf.mxu0
        %v889 = vadd.f32 %v435, %v888
        %v890 = vpop.f32.mrf.mxu0
        %v891 = vadd.f32 %v435, %v890
        %892 = vdwg.mxu0
        %893 = vmatpush.bf16.msra.mxu0 %v695
        %894 = vmatpush.bf16.msra.mxu0 %v691
        %895 = vmatpush.bf16.msra.mxu0 %v687
        %896 = vmatpush.bf16.msra.mxu0 %v683
        %897 = vmatpush.bf16.msra.mxu0 %v679
        %898 = vmatpush.bf16.msra.mxu0 %v675
        %899 = vmatpush.bf16.msra.mxu0 %v671
        %900 = vmatpush.bf16.msra.mxu0 %v667
        %901 = vmatmul.bf16.gmra.mxu0 %v363
        %v902 = vpop.f32.mrf.mxu0
        %v903 = vadd.f32 %v884, %v902
        %v904 = vpop.f32.mrf.mxu0
        %v905 = vadd.f32 %v886, %v904
        %906 = vmatmul.bf16.gmra.mxu0 %v365
        %v907 = vpop.f32.mrf.mxu0
        %v908 = vadd.f32 %v889, %v907
        %v909 = vpop.f32.mrf.mxu0
        %v910 = vadd.f32 %v891, %v909
        %911 = vdwg.mxu0
        %v912 = vpack.c.bf16 %v827, %v789
        %v913 = vpack.c.bf16 %v903, %v865
        %v914 = vpack.c.bf16 %v829, %v791
        %v915 = vpack.c.bf16 %v905, %v867
        %v916 = vpack.c.bf16 %v832, %v794
        %v917 = vpack.c.bf16 %v908, %v870
        %v918 = vpack.c.bf16 %v834, %v796
        %v919 = vpack.c.bf16 %v910, %v872
        %v920 = vunpack.c.l.bf16 %v912
        %v921 = vunpack.c.h.bf16 %v912
        %v922 = vunpack.c.l.bf16 %v913
        %v923 = vunpack.c.h.bf16 %v913
        %v924 = vunpack.c.l.bf16 %v914
        %v925 = vunpack.c.h.bf16 %v914
        %v926 = vunpack.c.l.bf16 %v915
        %v927 = vunpack.c.h.bf16 %v915
        %v928 = vunpack.c.l.bf16 %v916
        %v929 = vunpack.c.h.bf16 %v916
        %v930 = vunpack.c.l.bf16 %v917
        %v931 = vunpack.c.h.bf16 %v917
        %v932 = vunpack.c.l.bf16 %v918
        %v933 = vunpack.c.h.bf16 %v918
        %v934 = vunpack.c.l.bf16 %v919
        %v935 = vunpack.c.h.bf16 %v919
        %v936 = vmax.f32 %v920, 0.0
        %v937 = vmax.f32 %v921, 0.0
        %v938 = vmax.f32 %v922, 0.0
        %v939 = vmax.f32 %v923, 0.0
        %v940 = vmax.f32 %v924, 0.0
        %v941 = vmax.f32 %v925, 0.0
        %v942 = vmax.f32 %v926, 0.0
        %v943 = vmax.f32 %v927, 0.0
        %v944 = vmax.f32 %v928, 0.0
        %v945 = vmax.f32 %v929, 0.0
        %v946 = vmax.f32 %v930, 0.0
        %v947 = vmax.f32 %v931, 0.0
        %v948 = vmax.f32 %v932, 0.0
        %v949 = vmax.f32 %v933, 0.0
        %v950 = vmax.f32 %v934, 0.0
        %v951 = vmax.f32 %v935, 0.0
        %v952 = vpack.c.bf16 %v940, %v936
        %v953 = vpack.c.bf16 %v941, %v937
        %v954 = vpack.c.bf16 %v942, %v938
        %v955 = vpack.c.bf16 %v943, %v939
        %v956 = vpack.c.bf16 %v948, %v944
        %v957 = vpack.c.bf16 %v949, %v945
        %v958 = vpack.c.bf16 %v950, %v946
        %v959 = vpack.c.bf16 %v951, %v947
        %v960 = vld [vmem:[#allocation8] sm:$0xff]
        %v961 = vld [vmem:[#allocation8 + $0x8] sm:$0xff]
        %v962 = vld [vmem:[#allocation8 + $0x10] sm:$0xff]
        %v963 = vld [vmem:[#allocation8 + $0x18] sm:$0xff]
        %v964 = vld [vmem:[#allocation8 + $0x20] sm:$0xff]
        %v965 = vld [vmem:[#allocation8 + $0x28] sm:$0xff]
        %v966 = vld [vmem:[#allocation8 + $0x30] sm:$0xff]
        %v967 = vld [vmem:[#allocation8 + $0x38] sm:$0xff]
        %v968 = vld [vmem:[#allocation8 + $0x40] sm:$0xff]
        %v969 = vld [vmem:[#allocation8 + $0x48] sm:$0xff]
        %v970 = vld [vmem:[#allocation8 + $0x50] sm:$0xff]
        %v971 = vld [vmem:[#allocation8 + $0x58] sm:$0xff]
        %v972 = vld [vmem:[#allocation8 + $0x60] sm:$0xff]
        %v973 = vld [vmem:[#allocation8 + $0x68] sm:$0xff]
        %v974 = vld [vmem:[#allocation8 + $0x70] sm:$0xff]
        %v975 = vld [vmem:[#allocation8 + $0x78] sm:$0xff]
        %v976 = vld [vmem:[#allocation8 + $0x80] sm:$0xff]
        %v977 = vld [vmem:[#allocation8 + $0x88] sm:$0xff]
        %v978 = vld [vmem:[#allocation8 + $0x90] sm:$0xff]
        %v979 = vld [vmem:[#allocation8 + $0x98] sm:$0xff]
        %v980 = vld [vmem:[#allocation8 + $0xa0] sm:$0xff]
        %v981 = vld [vmem:[#allocation8 + $0xa8] sm:$0xff]
        %v982 = vld [vmem:[#allocation8 + $0xb0] sm:$0xff]
        %v983 = vld [vmem:[#allocation8 + $0xb8] sm:$0xff]
        %v984 = vld [vmem:[#allocation8 + $0xc0] sm:$0xff]
        %v985 = vld [vmem:[#allocation8 + $0xc8] sm:$0xff]
        %v986 = vld [vmem:[#allocation8 + $0xd0] sm:$0xff]
        %v987 = vld [vmem:[#allocation8 + $0xd8] sm:$0xff]
        %v988 = vld [vmem:[#allocation8 + $0xe0] sm:$0xff]
        %v989 = vld [vmem:[#allocation8 + $0xe8] sm:$0xff]
        %v990 = vld [vmem:[#allocation8 + $0xf0] sm:$0xff]
        %v991 = vld [vmem:[#allocation8 + $0xf8] sm:$0xff]
        %v992 = vld [vmem:[#allocation8 + $0x100] sm:$0xff]
        %v993 = vld [vmem:[#allocation8 + $0x108] sm:$0xff]
        %v994 = vld [vmem:[#allocation8 + $0x110] sm:$0xff]
        %v995 = vld [vmem:[#allocation8 + $0x118] sm:$0xff]
        %v996 = vld [vmem:[#allocation8 + $0x120] sm:$0xff]
        %v997 = vld [vmem:[#allocation8 + $0x128] sm:$0xff]
        %v998 = vld [vmem:[#allocation8 + $0x130] sm:$0xff]
        %v999 = vld [vmem:[#allocation8 + $0x138] sm:$0xff]
        %v1000 = vld [vmem:[#allocation8 + $0x140] sm:$0xff]
        %v1001 = vld [vmem:[#allocation8 + $0x148] sm:$0xff]
        %v1002 = vld [vmem:[#allocation8 + $0x150] sm:$0xff]
        %v1003 = vld [vmem:[#allocation8 + $0x158] sm:$0xff]
        %v1004 = vld [vmem:[#allocation8 + $0x160] sm:$0xff]
        %v1005 = vld [vmem:[#allocation8 + $0x168] sm:$0xff]
        %v1006 = vld [vmem:[#allocation8 + $0x170] sm:$0xff]
        %v1007 = vld [vmem:[#allocation8 + $0x178] sm:$0xff]
        %v1008 = vld [vmem:[#allocation8 + $0x180] sm:$0xff]
        %v1009 = vld [vmem:[#allocation8 + $0x188] sm:$0xff]
        %v1010 = vld [vmem:[#allocation8 + $0x190] sm:$0xff]
        %v1011 = vld [vmem:[#allocation8 + $0x198] sm:$0xff]
        %v1012 = vld [vmem:[#allocation8 + $0x1a0] sm:$0xff]
        %v1013 = vld [vmem:[#allocation8 + $0x1a8] sm:$0xff]
        %v1014 = vld [vmem:[#allocation8 + $0x1b0] sm:$0xff]
        %v1015 = vld [vmem:[#allocation8 + $0x1b8] sm:$0xff]
        %v1016 = vld [vmem:[#allocation8 + $0x1c0] sm:$0xff]
        %v1017 = vld [vmem:[#allocation8 + $0x1c8] sm:$0xff]
        %v1018 = vld [vmem:[#allocation8 + $0x1d0] sm:$0xff]
        %v1019 = vld [vmem:[#allocation8 + $0x1d8] sm:$0xff]
        %v1020 = vld [vmem:[#allocation8 + $0x1e0] sm:$0xff]
        %v1021 = vld [vmem:[#allocation8 + $0x1e8] sm:$0xff]
        %v1022 = vld [vmem:[#allocation8 + $0x1f0] sm:$0xff]
        %v1023 = vld [vmem:[#allocation8 + $0x1f8] sm:$0xff]
        %v1024 = vld [vmem:[#allocation8 + $0x200] sm:$0xff]
        %v1025 = vld [vmem:[#allocation8 + $0x208] sm:$0xff]
        %v1026 = vld [vmem:[#allocation8 + $0x210] sm:$0xff]
        %v1027 = vld [vmem:[#allocation8 + $0x218] sm:$0xff]
        %v1028 = vld [vmem:[#allocation8 + $0x220] sm:$0xff]
        %v1029 = vld [vmem:[#allocation8 + $0x228] sm:$0xff]
        %v1030 = vld [vmem:[#allocation8 + $0x230] sm:$0xff]
        %v1031 = vld [vmem:[#allocation8 + $0x238] sm:$0xff]
        %v1032 = vld [vmem:[#allocation8 + $0x240] sm:$0xff]
        %v1033 = vld [vmem:[#allocation8 + $0x248] sm:$0xff]
        %v1034 = vld [vmem:[#allocation8 + $0x250] sm:$0xff]
        %v1035 = vld [vmem:[#allocation8 + $0x258] sm:$0xff]
        %v1036 = vld [vmem:[#allocation8 + $0x260] sm:$0xff]
        %v1037 = vld [vmem:[#allocation8 + $0x268] sm:$0xff]
        %v1038 = vld [vmem:[#allocation8 + $0x270] sm:$0xff]
        %v1039 = vld [vmem:[#allocation8 + $0x278] sm:$0xff]
        %v1040 = vld [vmem:[#allocation8 + $0x280] sm:$0xff]
        %v1041 = vld [vmem:[#allocation8 + $0x288] sm:$0xff]
        %v1042 = vld [vmem:[#allocation8 + $0x290] sm:$0xff]
        %v1043 = vld [vmem:[#allocation8 + $0x298] sm:$0xff]
        %v1044 = vld [vmem:[#allocation8 + $0x2a0] sm:$0xff]
        %v1045 = vld [vmem:[#allocation8 + $0x2a8] sm:$0xff]
        %v1046 = vld [vmem:[#allocation8 + $0x2b0] sm:$0xff]
        %v1047 = vld [vmem:[#allocation8 + $0x2b8] sm:$0xff]
        %v1048 = vld [vmem:[#allocation8 + $0x2c0] sm:$0xff]
        %v1049 = vld [vmem:[#allocation8 + $0x2c8] sm:$0xff]
        %v1050 = vld [vmem:[#allocation8 + $0x2d0] sm:$0xff]
        %v1051 = vld [vmem:[#allocation8 + $0x2d8] sm:$0xff]
        %v1052 = vld [vmem:[#allocation8 + $0x2e0] sm:$0xff]
        %v1053 = vld [vmem:[#allocation8 + $0x2e8] sm:$0xff]
        %v1054 = vld [vmem:[#allocation8 + $0x2f0] sm:$0xff]
        %v1055 = vld [vmem:[#allocation8 + $0x2f8] sm:$0xff]
        %v1056 = vld [vmem:[#allocation8 + $0x300] sm:$0xff]
        %v1057 = vld [vmem:[#allocation8 + $0x308] sm:$0xff]
        %v1058 = vld [vmem:[#allocation8 + $0x310] sm:$0xff]
        %v1059 = vld [vmem:[#allocation8 + $0x318] sm:$0xff]
        %v1060 = vld [vmem:[#allocation8 + $0x320] sm:$0xff]
        %v1061 = vld [vmem:[#allocation8 + $0x328] sm:$0xff]
        %v1062 = vld [vmem:[#allocation8 + $0x330] sm:$0xff]
        %v1063 = vld [vmem:[#allocation8 + $0x338] sm:$0xff]
        %v1064 = vld [vmem:[#allocation8 + $0x340] sm:$0xff]
        %v1065 = vld [vmem:[#allocation8 + $0x348] sm:$0xff]
        %v1066 = vld [vmem:[#allocation8 + $0x350] sm:$0xff]
        %v1067 = vld [vmem:[#allocation8 + $0x358] sm:$0xff]
        %v1068 = vld [vmem:[#allocation8 + $0x360] sm:$0xff]
        %v1069 = vld [vmem:[#allocation8 + $0x368] sm:$0xff]
        %v1070 = vld [vmem:[#allocation8 + $0x370] sm:$0xff]
        %v1071 = vld [vmem:[#allocation8 + $0x378] sm:$0xff]
        %v1072 = vld [vmem:[#allocation8 + $0x380] sm:$0xff]
        %v1073 = vld [vmem:[#allocation8 + $0x388] sm:$0xff]
        %v1074 = vld [vmem:[#allocation8 + $0x390] sm:$0xff]
        %v1075 = vld [vmem:[#allocation8 + $0x398] sm:$0xff]
        %v1076 = vld [vmem:[#allocation8 + $0x3a0] sm:$0xff]
        %v1077 = vld [vmem:[#allocation8 + $0x3a8] sm:$0xff]
        %v1078 = vld [vmem:[#allocation8 + $0x3b0] sm:$0xff]
        %v1079 = vld [vmem:[#allocation8 + $0x3b8] sm:$0xff]
        %v1080 = vld [vmem:[#allocation8 + $0x3c0] sm:$0xff]
        %v1081 = vld [vmem:[#allocation8 + $0x3c8] sm:$0xff]
        %v1082 = vld [vmem:[#allocation8 + $0x3d0] sm:$0xff]
        %v1083 = vld [vmem:[#allocation8 + $0x3d8] sm:$0xff]
        %v1084 = vld [vmem:[#allocation8 + $0x3e0] sm:$0xff]
        %v1085 = vld [vmem:[#allocation8 + $0x3e8] sm:$0xff]
        %v1086 = vld [vmem:[#allocation8 + $0x3f0] sm:$0xff]
        %v1087 = vld [vmem:[#allocation8 + $0x3f8] sm:$0xff]
        %v1088 = vld [vmem:[#allocation10] sm:$0xf]
        %v1090 = vperm.slane %v1088, 0
        %v1091 = vperm.slane %v1088, 1
        %v1092 = vperm.slane %v1088, 2
        %v1093 = vperm.slane %v1088, 3
        %v1226 = vunpack.c.l.b16 %v960
        %v1227 = vunpack.c.h.b16 %v960
        %v1228 = vunpack.c.l.b16 %v961
        %v1229 = vunpack.c.h.b16 %v961
        %v1230 = vunpack.c.l.b16 %v962
        %v1231 = vunpack.c.h.b16 %v962
        %v1232 = vunpack.c.l.b16 %v963
        %v1233 = vunpack.c.h.b16 %v963
        %v1234 = vunpack.c.l.b16 %v964
        %v1235 = vunpack.c.h.b16 %v964
        %v1236 = vunpack.c.l.b16 %v965
        %v1237 = vunpack.c.h.b16 %v965
        %v1238 = vunpack.c.l.b16 %v966
        %v1239 = vunpack.c.h.b16 %v966
        %v1240 = vunpack.c.l.b16 %v967
        %v1241 = vunpack.c.h.b16 %v967
        %v1242 = vunpack.c.l.b16 %v968
        %v1243 = vunpack.c.h.b16 %v968
        %v1244 = vunpack.c.l.b16 %v969
        %v1245 = vunpack.c.h.b16 %v969
        %v1246 = vunpack.c.l.b16 %v970
        %v1247 = vunpack.c.h.b16 %v970
        %v1248 = vunpack.c.l.b16 %v971
        %v1249 = vunpack.c.h.b16 %v971
        %v1250 = vunpack.c.l.b16 %v972
        %v1251 = vunpack.c.h.b16 %v972
        %v1252 = vunpack.c.l.b16 %v973
        %v1253 = vunpack.c.h.b16 %v973
        %v1254 = vunpack.c.l.b16 %v974
        %v1255 = vunpack.c.h.b16 %v974
        %v1256 = vunpack.c.l.b16 %v975
        %v1257 = vunpack.c.h.b16 %v975
        %v1258 = vunpack.c.l.b16 %v976
        %v1259 = vunpack.c.h.b16 %v976
        %v1260 = vunpack.c.l.b16 %v977
        %v1261 = vunpack.c.h.b16 %v977
        %v1262 = vunpack.c.l.b16 %v978
        %v1263 = vunpack.c.h.b16 %v978
        %v1264 = vunpack.c.l.b16 %v979
        %v1265 = vunpack.c.h.b16 %v979
        %v1266 = vunpack.c.l.b16 %v980
        %v1267 = vunpack.c.h.b16 %v980
        %v1268 = vunpack.c.l.b16 %v981
        %v1269 = vunpack.c.h.b16 %v981
        %v1270 = vunpack.c.l.b16 %v982
        %v1271 = vunpack.c.h.b16 %v982
        %v1272 = vunpack.c.l.b16 %v983
        %v1273 = vunpack.c.h.b16 %v983
        %v1274 = vunpack.c.l.b16 %v984
        %v1275 = vunpack.c.h.b16 %v984
        %v1276 = vunpack.c.l.b16 %v985
        %v1277 = vunpack.c.h.b16 %v985
        %v1278 = vunpack.c.l.b16 %v986
        %v1279 = vunpack.c.h.b16 %v986
        %v1280 = vunpack.c.l.b16 %v987
        %v1281 = vunpack.c.h.b16 %v987
        %v1282 = vunpack.c.l.b16 %v988
        %v1283 = vunpack.c.h.b16 %v988
        %v1284 = vunpack.c.l.b16 %v989
        %v1285 = vunpack.c.h.b16 %v989
        %v1286 = vunpack.c.l.b16 %v990
        %v1287 = vunpack.c.h.b16 %v990
        %v1288 = vunpack.c.l.b16 %v991
        %v1289 = vunpack.c.h.b16 %v991
        %v1290 = vunpack.c.l.b16 %v992
        %v1291 = vunpack.c.h.b16 %v992
        %v1292 = vunpack.c.l.b16 %v993
        %v1293 = vunpack.c.h.b16 %v993
        %v1294 = vunpack.c.l.b16 %v994
        %v1295 = vunpack.c.h.b16 %v994
        %v1296 = vunpack.c.l.b16 %v995
        %v1297 = vunpack.c.h.b16 %v995
        %v1298 = vunpack.c.l.b16 %v996
        %v1299 = vunpack.c.h.b16 %v996
        %v1300 = vunpack.c.l.b16 %v997
        %v1301 = vunpack.c.h.b16 %v997
        %v1302 = vunpack.c.l.b16 %v998
        %v1303 = vunpack.c.h.b16 %v998
        %v1304 = vunpack.c.l.b16 %v999
        %v1305 = vunpack.c.h.b16 %v999
        %v1306 = vunpack.c.l.b16 %v1000
        %v1307 = vunpack.c.h.b16 %v1000
        %v1308 = vunpack.c.l.b16 %v1001
        %v1309 = vunpack.c.h.b16 %v1001
        %v1310 = vunpack.c.l.b16 %v1002
        %v1311 = vunpack.c.h.b16 %v1002
        %v1312 = vunpack.c.l.b16 %v1003
        %v1313 = vunpack.c.h.b16 %v1003
        %v1314 = vunpack.c.l.b16 %v1004
        %v1315 = vunpack.c.h.b16 %v1004
        %v1316 = vunpack.c.l.b16 %v1005
        %v1317 = vunpack.c.h.b16 %v1005
        %v1318 = vunpack.c.l.b16 %v1006
        %v1319 = vunpack.c.h.b16 %v1006
        %v1320 = vunpack.c.l.b16 %v1007
        %v1321 = vunpack.c.h.b16 %v1007
        %v1322 = vunpack.c.l.b16 %v1008
        %v1323 = vunpack.c.h.b16 %v1008
        %v1324 = vunpack.c.l.b16 %v1009
        %v1325 = vunpack.c.h.b16 %v1009
        %v1326 = vunpack.c.l.b16 %v1010
        %v1327 = vunpack.c.h.b16 %v1010
        %v1328 = vunpack.c.l.b16 %v1011
        %v1329 = vunpack.c.h.b16 %v1011
        %v1330 = vunpack.c.l.b16 %v1012
        %v1331 = vunpack.c.h.b16 %v1012
        %v1332 = vunpack.c.l.b16 %v1013
        %v1333 = vunpack.c.h.b16 %v1013
        %v1334 = vunpack.c.l.b16 %v1014
        %v1335 = vunpack.c.h.b16 %v1014
        %v1336 = vunpack.c.l.b16 %v1015
        %v1337 = vunpack.c.h.b16 %v1015
        %v1338 = vunpack.c.l.b16 %v1016
        %v1339 = vunpack.c.h.b16 %v1016
        %v1340 = vunpack.c.l.b16 %v1017
        %v1341 = vunpack.c.h.b16 %v1017
        %v1342 = vunpack.c.l.b16 %v1018
        %v1343 = vunpack.c.h.b16 %v1018
        %v1344 = vunpack.c.l.b16 %v1019
        %v1345 = vunpack.c.h.b16 %v1019
        %v1346 = vunpack.c.l.b16 %v1020
        %v1347 = vunpack.c.h.b16 %v1020
        %v1348 = vunpack.c.l.b16 %v1021
        %v1349 = vunpack.c.h.b16 %v1021
        %v1350 = vunpack.c.l.b16 %v1022
        %v1351 = vunpack.c.h.b16 %v1022
        %v1352 = vunpack.c.l.b16 %v1023
        %v1353 = vunpack.c.h.b16 %v1023
        %v1354 = vunpack.c.l.b16 %v1024
        %v1355 = vunpack.c.h.b16 %v1024
        %v1356 = vunpack.c.l.b16 %v1025
        %v1357 = vunpack.c.h.b16 %v1025
        %v1358 = vunpack.c.l.b16 %v1026
        %v1359 = vunpack.c.h.b16 %v1026
        %v1360 = vunpack.c.l.b16 %v1027
        %v1361 = vunpack.c.h.b16 %v1027
        %v1362 = vunpack.c.l.b16 %v1028
        %v1363 = vunpack.c.h.b16 %v1028
        %v1364 = vunpack.c.l.b16 %v1029
        %v1365 = vunpack.c.h.b16 %v1029
        %v1366 = vunpack.c.l.b16 %v1030
        %v1367 = vunpack.c.h.b16 %v1030
        %v1368 = vunpack.c.l.b16 %v1031
        %v1369 = vunpack.c.h.b16 %v1031
        %v1370 = vunpack.c.l.b16 %v1032
        %v1371 = vunpack.c.h.b16 %v1032
        %v1372 = vunpack.c.l.b16 %v1033
        %v1373 = vunpack.c.h.b16 %v1033
        %v1374 = vunpack.c.l.b16 %v1034
        %v1375 = vunpack.c.h.b16 %v1034
        %v1376 = vunpack.c.l.b16 %v1035
        %v1377 = vunpack.c.h.b16 %v1035
        %v1378 = vunpack.c.l.b16 %v1036
        %v1379 = vunpack.c.h.b16 %v1036
        %v1380 = vunpack.c.l.b16 %v1037
        %v1381 = vunpack.c.h.b16 %v1037
        %v1382 = vunpack.c.l.b16 %v1038
        %v1383 = vunpack.c.h.b16 %v1038
        %v1384 = vunpack.c.l.b16 %v1039
        %v1385 = vunpack.c.h.b16 %v1039
        %v1386 = vunpack.c.l.b16 %v1040
        %v1387 = vunpack.c.h.b16 %v1040
        %v1388 = vunpack.c.l.b16 %v1041
        %v1389 = vunpack.c.h.b16 %v1041
        %v1390 = vunpack.c.l.b16 %v1042
        %v1391 = vunpack.c.h.b16 %v1042
        %v1392 = vunpack.c.l.b16 %v1043
        %v1393 = vunpack.c.h.b16 %v1043
        %v1394 = vunpack.c.l.b16 %v1044
        %v1395 = vunpack.c.h.b16 %v1044
        %v1396 = vunpack.c.l.b16 %v1045
        %v1397 = vunpack.c.h.b16 %v1045
        %v1398 = vunpack.c.l.b16 %v1046
        %v1399 = vunpack.c.h.b16 %v1046
        %v1400 = vunpack.c.l.b16 %v1047
        %v1401 = vunpack.c.h.b16 %v1047
        %v1402 = vunpack.c.l.b16 %v1048
        %v1403 = vunpack.c.h.b16 %v1048
        %v1404 = vunpack.c.l.b16 %v1049
        %v1405 = vunpack.c.h.b16 %v1049
        %v1406 = vunpack.c.l.b16 %v1050
        %v1407 = vunpack.c.h.b16 %v1050
        %v1408 = vunpack.c.l.b16 %v1051
        %v1409 = vunpack.c.h.b16 %v1051
        %v1410 = vunpack.c.l.b16 %v1052
        %v1411 = vunpack.c.h.b16 %v1052
        %v1412 = vunpack.c.l.b16 %v1053
        %v1413 = vunpack.c.h.b16 %v1053
        %v1414 = vunpack.c.l.b16 %v1054
        %v1415 = vunpack.c.h.b16 %v1054
        %v1416 = vunpack.c.l.b16 %v1055
        %v1417 = vunpack.c.h.b16 %v1055
        %v1418 = vunpack.c.l.b16 %v1056
        %v1419 = vunpack.c.h.b16 %v1056
        %v1420 = vunpack.c.l.b16 %v1057
        %v1421 = vunpack.c.h.b16 %v1057
        %v1422 = vunpack.c.l.b16 %v1058
        %v1423 = vunpack.c.h.b16 %v1058
        %v1424 = vunpack.c.l.b16 %v1059
        %v1425 = vunpack.c.h.b16 %v1059
        %v1426 = vunpack.c.l.b16 %v1060
        %v1427 = vunpack.c.h.b16 %v1060
        %v1428 = vunpack.c.l.b16 %v1061
        %v1429 = vunpack.c.h.b16 %v1061
        %v1430 = vunpack.c.l.b16 %v1062
        %v1431 = vunpack.c.h.b16 %v1062
        %v1432 = vunpack.c.l.b16 %v1063
        %v1433 = vunpack.c.h.b16 %v1063
        %v1434 = vunpack.c.l.b16 %v1064
        %v1435 = vunpack.c.h.b16 %v1064
        %v1436 = vunpack.c.l.b16 %v1065
        %v1437 = vunpack.c.h.b16 %v1065
        %v1438 = vunpack.c.l.b16 %v1066
        %v1439 = vunpack.c.h.b16 %v1066
        %v1440 = vunpack.c.l.b16 %v1067
        %v1441 = vunpack.c.h.b16 %v1067
        %v1442 = vunpack.c.l.b16 %v1068
        %v1443 = vunpack.c.h.b16 %v1068
        %v1444 = vunpack.c.l.b16 %v1069
        %v1445 = vunpack.c.h.b16 %v1069
        %v1446 = vunpack.c.l.b16 %v1070
        %v1447 = vunpack.c.h.b16 %v1070
        %v1448 = vunpack.c.l.b16 %v1071
        %v1449 = vunpack.c.h.b16 %v1071
        %v1450 = vunpack.c.l.b16 %v1072
        %v1451 = vunpack.c.h.b16 %v1072
        %v1452 = vunpack.c.l.b16 %v1073
        %v1453 = vunpack.c.h.b16 %v1073
        %v1454 = vunpack.c.l.b16 %v1074
        %v1455 = vunpack.c.h.b16 %v1074
        %v1456 = vunpack.c.l.b16 %v1075
        %v1457 = vunpack.c.h.b16 %v1075
        %v1458 = vunpack.c.l.b16 %v1076
        %v1459 = vunpack.c.h.b16 %v1076
        %v1460 = vunpack.c.l.b16 %v1077
        %v1461 = vunpack.c.h.b16 %v1077
        %v1462 = vunpack.c.l.b16 %v1078
        %v1463 = vunpack.c.h.b16 %v1078
        %v1464 = vunpack.c.l.b16 %v1079
        %v1465 = vunpack.c.h.b16 %v1079
        %v1466 = vunpack.c.l.b16 %v1080
        %v1467 = vunpack.c.h.b16 %v1080
        %v1468 = vunpack.c.l.b16 %v1081
        %v1469 = vunpack.c.h.b16 %v1081
        %v1470 = vunpack.c.l.b16 %v1082
        %v1471 = vunpack.c.h.b16 %v1082
        %v1472 = vunpack.c.l.b16 %v1083
        %v1473 = vunpack.c.h.b16 %v1083
        %v1474 = vunpack.c.l.b16 %v1084
        %v1475 = vunpack.c.h.b16 %v1084
        %v1476 = vunpack.c.l.b16 %v1085
        %v1477 = vunpack.c.h.b16 %v1085
        %v1478 = vunpack.c.l.b16 %v1086
        %v1479 = vunpack.c.h.b16 %v1086
        %v1480 = vunpack.c.l.b16 %v1087
        %v1481 = vunpack.c.h.b16 %v1087
        %v1482 = vpack.c.b16 %v1230, %v1226
        %v1483 = vpack.c.b16 %v1231, %v1227
        %v1484 = vpack.c.b16 %v1232, %v1228
        %v1485 = vpack.c.b16 %v1233, %v1229
        %v1486 = vpack.c.b16 %v1238, %v1234
        %v1487 = vpack.c.b16 %v1239, %v1235
        %v1488 = vpack.c.b16 %v1240, %v1236
        %v1489 = vpack.c.b16 %v1241, %v1237
        %v1490 = vpack.c.b16 %v1246, %v1242
        %v1491 = vpack.c.b16 %v1247, %v1243
        %v1492 = vpack.c.b16 %v1248, %v1244
        %v1493 = vpack.c.b16 %v1249, %v1245
        %v1494 = vpack.c.b16 %v1254, %v1250
        %v1495 = vpack.c.b16 %v1255, %v1251
        %v1496 = vpack.c.b16 %v1256, %v1252
        %v1497 = vpack.c.b16 %v1257, %v1253
        %v1498 = vpack.c.b16 %v1262, %v1258
        %v1499 = vpack.c.b16 %v1263, %v1259
        %v1500 = vpack.c.b16 %v1264, %v1260
        %v1501 = vpack.c.b16 %v1265, %v1261
        %v1502 = vpack.c.b16 %v1270, %v1266
        %v1503 = vpack.c.b16 %v1271, %v1267
        %v1504 = vpack.c.b16 %v1272, %v1268
        %v1505 = vpack.c.b16 %v1273, %v1269
        %v1506 = vpack.c.b16 %v1278, %v1274
        %v1507 = vpack.c.b16 %v1279, %v1275
        %v1508 = vpack.c.b16 %v1280, %v1276
        %v1509 = vpack.c.b16 %v1281, %v1277
        %v1510 = vpack.c.b16 %v1286, %v1282
        %v1511 = vpack.c.b16 %v1287, %v1283
        %v1512 = vpack.c.b16 %v1288, %v1284
        %v1513 = vpack.c.b16 %v1289, %v1285
        %v1514 = vpack.c.b16 %v1294, %v1290
        %v1515 = vpack.c.b16 %v1295, %v1291
        %v1516 = vpack.c.b16 %v1296, %v1292
        %v1517 = vpack.c.b16 %v1297, %v1293
        %v1518 = vpack.c.b16 %v1302, %v1298
        %v1519 = vpack.c.b16 %v1303, %v1299
        %v1520 = vpack.c.b16 %v1304, %v1300
        %v1521 = vpack.c.b16 %v1305, %v1301
        %v1522 = vpack.c.b16 %v1310, %v1306
        %v1523 = vpack.c.b16 %v1311, %v1307
        %v1524 = vpack.c.b16 %v1312, %v1308
        %v1525 = vpack.c.b16 %v1313, %v1309
        %v1526 = vpack.c.b16 %v1318, %v1314
        %v1527 = vpack.c.b16 %v1319, %v1315
        %v1528 = vpack.c.b16 %v1320, %v1316
        %v1529 = vpack.c.b16 %v1321, %v1317
        %v1530 = vpack.c.b16 %v1326, %v1322
        %v1531 = vpack.c.b16 %v1327, %v1323
        %v1532 = vpack.c.b16 %v1328, %v1324
        %v1533 = vpack.c.b16 %v1329, %v1325
        %v1534 = vpack.c.b16 %v1334, %v1330
        %v1535 = vpack.c.b16 %v1335, %v1331
        %v1536 = vpack.c.b16 %v1336, %v1332
        %v1537 = vpack.c.b16 %v1337, %v1333
        %v1538 = vpack.c.b16 %v1342, %v1338
        %v1539 = vpack.c.b16 %v1343, %v1339
        %v1540 = vpack.c.b16 %v1344, %v1340
        %v1541 = vpack.c.b16 %v1345, %v1341
        %v1542 = vpack.c.b16 %v1350, %v1346
        %v1543 = vpack.c.b16 %v1351, %v1347
        %v1544 = vpack.c.b16 %v1352, %v1348
        %v1545 = vpack.c.b16 %v1353, %v1349
        %v1546 = vpack.c.b16 %v1358, %v1354
        %v1547 = vpack.c.b16 %v1359, %v1355
        %v1548 = vpack.c.b16 %v1360, %v1356
        %v1549 = vpack.c.b16 %v1361, %v1357
        %v1550 = vpack.c.b16 %v1366, %v1362
        %v1551 = vpack.c.b16 %v1367, %v1363
        %v1552 = vpack.c.b16 %v1368, %v1364
        %v1553 = vpack.c.b16 %v1369, %v1365
        %v1554 = vpack.c.b16 %v1374, %v1370
        %v1555 = vpack.c.b16 %v1375, %v1371
        %v1556 = vpack.c.b16 %v1376, %v1372
        %v1557 = vpack.c.b16 %v1377, %v1373
        %v1558 = vpack.c.b16 %v1382, %v1378
        %v1559 = vpack.c.b16 %v1383, %v1379
        %v1560 = vpack.c.b16 %v1384, %v1380
        %v1561 = vpack.c.b16 %v1385, %v1381
        %v1562 = vpack.c.b16 %v1390, %v1386
        %v1563 = vpack.c.b16 %v1391, %v1387
        %v1564 = vpack.c.b16 %v1392, %v1388
        %v1565 = vpack.c.b16 %v1393, %v1389
        %v1566 = vpack.c.b16 %v1398, %v1394
        %v1567 = vpack.c.b16 %v1399, %v1395
        %v1568 = vpack.c.b16 %v1400, %v1396
        %v1569 = vpack.c.b16 %v1401, %v1397
        %v1570 = vpack.c.b16 %v1406, %v1402
        %v1571 = vpack.c.b16 %v1407, %v1403
        %v1572 = vpack.c.b16 %v1408, %v1404
        %v1573 = vpack.c.b16 %v1409, %v1405
        %v1574 = vpack.c.b16 %v1414, %v1410
        %v1575 = vpack.c.b16 %v1415, %v1411
        %v1576 = vpack.c.b16 %v1416, %v1412
        %v1577 = vpack.c.b16 %v1417, %v1413
        %v1578 = vpack.c.b16 %v1422, %v1418
        %v1579 = vpack.c.b16 %v1423, %v1419
        %v1580 = vpack.c.b16 %v1424, %v1420
        %v1581 = vpack.c.b16 %v1425, %v1421
        %v1582 = vpack.c.b16 %v1430, %v1426
        %v1583 = vpack.c.b16 %v1431, %v1427
        %v1584 = vpack.c.b16 %v1432, %v1428
        %v1585 = vpack.c.b16 %v1433, %v1429
        %v1586 = vpack.c.b16 %v1438, %v1434
        %v1587 = vpack.c.b16 %v1439, %v1435
        %v1588 = vpack.c.b16 %v1440, %v1436
        %v1589 = vpack.c.b16 %v1441, %v1437
        %v1590 = vpack.c.b16 %v1446, %v1442
        %v1591 = vpack.c.b16 %v1447, %v1443
        %v1592 = vpack.c.b16 %v1448, %v1444
        %v1593 = vpack.c.b16 %v1449, %v1445
        %v1594 = vpack.c.b16 %v1454, %v1450
        %v1595 = vpack.c.b16 %v1455, %v1451
        %v1596 = vpack.c.b16 %v1456, %v1452
        %v1597 = vpack.c.b16 %v1457, %v1453
        %v1598 = vpack.c.b16 %v1462, %v1458
        %v1599 = vpack.c.b16 %v1463, %v1459
        %v1600 = vpack.c.b16 %v1464, %v1460
        %v1601 = vpack.c.b16 %v1465, %v1461
        %v1602 = vpack.c.b16 %v1470, %v1466
        %v1603 = vpack.c.b16 %v1471, %v1467
        %v1604 = vpack.c.b16 %v1472, %v1468
        %v1605 = vpack.c.b16 %v1473, %v1469
        %v1606 = vpack.c.b16 %v1478, %v1474
        %v1607 = vpack.c.b16 %v1479, %v1475
        %v1608 = vpack.c.b16 %v1480, %v1476
        %v1609 = vpack.c.b16 %v1481, %v1477
        %1738 = vmatpush.bf16.msra.mxu0 %v1510
        %1739 = vmatpush.bf16.msra.mxu0 %v1506
        %1740 = vmatpush.bf16.msra.mxu0 %v1502
        %1741 = vmatpush.bf16.msra.mxu0 %v1498
        %1742 = vmatpush.bf16.msra.mxu0 %v1494
        %1743 = vmatpush.bf16.msra.mxu0 %v1490
        %1744 = vmatpush.bf16.msra.mxu0 %v1486
        %1745 = vmatpush.bf16.msra.mxu0 %v1482
        %1746 = vmatmul.bf16.gmra.mxu0 %v952
        %v1747 = vpop.f32.mrf.mxu0
        %v1748 = vadd.f32 %v1090, %v1747
        %v1749 = vpop.f32.mrf.mxu0
        %v1750 = vadd.f32 %v1090, %v1749
        %1751 = vmatmul.bf16.gmra.mxu0 %v956
        %v1752 = vpop.f32.mrf.mxu0
        %v1753 = vadd.f32 %v1090, %v1752
        %v1754 = vpop.f32.mrf.mxu0
        %v1755 = vadd.f32 %v1090, %v1754
        %1756 = vdwg.mxu0
        %1757 = vmatpush.bf16.msra.mxu0 %v1542
        %1758 = vmatpush.bf16.msra.mxu0 %v1538
        %1759 = vmatpush.bf16.msra.mxu0 %v1534
        %1760 = vmatpush.bf16.msra.mxu0 %v1530
        %1761 = vmatpush.bf16.msra.mxu0 %v1526
        %1762 = vmatpush.bf16.msra.mxu0 %v1522
        %1763 = vmatpush.bf16.msra.mxu0 %v1518
        %1764 = vmatpush.bf16.msra.mxu0 %v1514
        %1765 = vmatmul.bf16.gmra.mxu0 %v953
        %v1766 = vpop.f32.mrf.mxu0
        %v1767 = vadd.f32 %v1748, %v1766
        %v1768 = vpop.f32.mrf.mxu0
        %v1769 = vadd.f32 %v1750, %v1768
        %1770 = vmatmul.bf16.gmra.mxu0 %v957
        %v1771 = vpop.f32.mrf.mxu0
        %v1772 = vadd.f32 %v1753, %v1771
        %v1773 = vpop.f32.mrf.mxu0
        %v1774 = vadd.f32 %v1755, %v1773
        %1775 = vdwg.mxu0
        %1776 = vmatpush.bf16.msra.mxu0 %v1574
        %1777 = vmatpush.bf16.msra.mxu0 %v1570
        %1778 = vmatpush.bf16.msra.mxu0 %v1566
        %1779 = vmatpush.bf16.msra.mxu0 %v1562
        %1780 = vmatpush.bf16.msra.mxu0 %v1558
        %1781 = vmatpush.bf16.msra.mxu0 %v1554
        %1782 = vmatpush.bf16.msra.mxu0 %v1550
        %1783 = vmatpush.bf16.msra.mxu0 %v1546
        %1784 = vmatmul.bf16.gmra.mxu0 %v954
        %v1785 = vpop.f32.mrf.mxu0
        %v1786 = vadd.f32 %v1767, %v1785
        %v1787 = vpop.f32.mrf.mxu0
        %v1788 = vadd.f32 %v1769, %v1787
        %1789 = vmatmul.bf16.gmra.mxu0 %v958
        %v1790 = vpop.f32.mrf.mxu0
        %v1791 = vadd.f32 %v1772, %v1790
        %v1792 = vpop.f32.mrf.mxu0
        %v1793 = vadd.f32 %v1774, %v1792
        %1794 = vdwg.mxu0
        %1795 = vmatpush.bf16.msra.mxu0 %v1606
        %1796 = vmatpush.bf16.msra.mxu0 %v1602
        %1797 = vmatpush.bf16.msra.mxu0 %v1598
        %1798 = vmatpush.bf16.msra.mxu0 %v1594
        %1799 = vmatpush.bf16.msra.mxu0 %v1590
        %1800 = vmatpush.bf16.msra.mxu0 %v1586
        %1801 = vmatpush.bf16.msra.mxu0 %v1582
        %1802 = vmatpush.bf16.msra.mxu0 %v1578
        %1803 = vmatmul.bf16.gmra.mxu0 %v955
        %v1804 = vpop.f32.mrf.mxu0
        %v1805 = vadd.f32 %v1786, %v1804
        %v1806 = vpop.f32.mrf.mxu0
        %v1807 = vadd.f32 %v1788, %v1806
        %1808 = vmatmul.bf16.gmra.mxu0 %v959
        %v1809 = vpop.f32.mrf.mxu0
        %v1810 = vadd.f32 %v1791, %v1809
        %v1811 = vpop.f32.mrf.mxu0
        %v1812 = vadd.f32 %v1793, %v1811
        %1813 = vdwg.mxu0
        %1814 = vmatpush.bf16.msra.mxu0 %v1511
        %1815 = vmatpush.bf16.msra.mxu0 %v1507
        %1816 = vmatpush.bf16.msra.mxu0 %v1503
        %1817 = vmatpush.bf16.msra.mxu0 %v1499
        %1818 = vmatpush.bf16.msra.mxu0 %v1495
        %1819 = vmatpush.bf16.msra.mxu0 %v1491
        %1820 = vmatpush.bf16.msra.mxu0 %v1487
        %1821 = vmatpush.bf16.msra.mxu0 %v1483
        %1822 = vmatmul.bf16.gmra.mxu0 %v952
        %v1823 = vpop.f32.mrf.mxu0
        %v1824 = vadd.f32 %v1091, %v1823
        %v1825 = vpop.f32.mrf.mxu0
        %v1826 = vadd.f32 %v1091, %v1825
        %1827 = vmatmul.bf16.gmra.mxu0 %v956
        %v1828 = vpop.f32.mrf.mxu0
        %v1829 = vadd.f32 %v1091, %v1828
        %v1830 = vpop.f32.mrf.mxu0
        %v1831 = vadd.f32 %v1091, %v1830
        %1832 = vdwg.mxu0
        %1833 = vmatpush.bf16.msra.mxu0 %v1543
        %1834 = vmatpush.bf16.msra.mxu0 %v1539
        %1835 = vmatpush.bf16.msra.mxu0 %v1535
        %1836 = vmatpush.bf16.msra.mxu0 %v1531
        %1837 = vmatpush.bf16.msra.mxu0 %v1527
        %1838 = vmatpush.bf16.msra.mxu0 %v1523
        %1839 = vmatpush.bf16.msra.mxu0 %v1519
        %1840 = vmatpush.bf16.msra.mxu0 %v1515
        %1841 = vmatmul.bf16.gmra.mxu0 %v953
        %v1842 = vpop.f32.mrf.mxu0
        %v1843 = vadd.f32 %v1824, %v1842
        %v1844 = vpop.f32.mrf.mxu0
        %v1845 = vadd.f32 %v1826, %v1844
        %1846 = vmatmul.bf16.gmra.mxu0 %v957
        %v1847 = vpop.f32.mrf.mxu0
        %v1848 = vadd.f32 %v1829, %v1847
        %v1849 = vpop.f32.mrf.mxu0
        %v1850 = vadd.f32 %v1831, %v1849
        %1851 = vdwg.mxu0
        %1852 = vmatpush.bf16.msra.mxu0 %v1575
        %1853 = vmatpush.bf16.msra.mxu0 %v1571
        %1854 = vmatpush.bf16.msra.mxu0 %v1567
        %1855 = vmatpush.bf16.msra.mxu0 %v1563
        %1856 = vmatpush.bf16.msra.mxu0 %v1559
        %1857 = vmatpush.bf16.msra.mxu0 %v1555
        %1858 = vmatpush.bf16.msra.mxu0 %v1551
        %1859 = vmatpush.bf16.msra.mxu0 %v1547
        %1860 = vmatmul.bf16.gmra.mxu0 %v954
        %v1861 = vpop.f32.mrf.mxu0
        %v1862 = vadd.f32 %v1843, %v1861
        %v1863 = vpop.f32.mrf.mxu0
        %v1864 = vadd.f32 %v1845, %v1863
        %1865 = vmatmul.bf16.gmra.mxu0 %v958
        %v1866 = vpop.f32.mrf.mxu0
        %v1867 = vadd.f32 %v1848, %v1866
        %v1868 = vpop.f32.mrf.mxu0
        %v1869 = vadd.f32 %v1850, %v1868
        %1870 = vdwg.mxu0
        %1871 = vmatpush.bf16.msra.mxu0 %v1607
        %1872 = vmatpush.bf16.msra.mxu0 %v1603
        %1873 = vmatpush.bf16.msra.mxu0 %v1599
        %1874 = vmatpush.bf16.msra.mxu0 %v1595
        %1875 = vmatpush.bf16.msra.mxu0 %v1591
        %1876 = vmatpush.bf16.msra.mxu0 %v1587
        %1877 = vmatpush.bf16.msra.mxu0 %v1583
        %1878 = vmatpush.bf16.msra.mxu0 %v1579
        %1879 = vmatmul.bf16.gmra.mxu0 %v955
        %v1880 = vpop.f32.mrf.mxu0
        %v1881 = vadd.f32 %v1862, %v1880
        %v1882 = vpop.f32.mrf.mxu0
        %v1883 = vadd.f32 %v1864, %v1882
        %1884 = vmatmul.bf16.gmra.mxu0 %v959
        %v1885 = vpop.f32.mrf.mxu0
        %v1886 = vadd.f32 %v1867, %v1885
        %v1887 = vpop.f32.mrf.mxu0
        %v1888 = vadd.f32 %v1869, %v1887
        %1889 = vdwg.mxu0
        %1890 = vmatpush.bf16.msra.mxu0 %v1512
        %1891 = vmatpush.bf16.msra.mxu0 %v1508
        %1892 = vmatpush.bf16.msra.mxu0 %v1504
        %1893 = vmatpush.bf16.msra.mxu0 %v1500
        %1894 = vmatpush.bf16.msra.mxu0 %v1496
        %1895 = vmatpush.bf16.msra.mxu0 %v1492
        %1896 = vmatpush.bf16.msra.mxu0 %v1488
        %1897 = vmatpush.bf16.msra.mxu0 %v1484
        %1898 = vmatmul.bf16.gmra.mxu0 %v952
        %v1899 = vpop.f32.mrf.mxu0
        %v1900 = vadd.f32 %v1092, %v1899
        %v1901 = vpop.f32.mrf.mxu0
        %v1902 = vadd.f32 %v1092, %v1901
        %1903 = vmatmul.bf16.gmra.mxu0 %v956
        %v1904 = vpop.f32.mrf.mxu0
        %v1905 = vadd.f32 %v1092, %v1904
        %v1906 = vpop.f32.mrf.mxu0
        %v1907 = vadd.f32 %v1092, %v1906
        %1908 = vdwg.mxu0
        %1909 = vmatpush.bf16.msra.mxu0 %v1544
        %1910 = vmatpush.bf16.msra.mxu0 %v1540
        %1911 = vmatpush.bf16.msra.mxu0 %v1536
        %1912 = vmatpush.bf16.msra.mxu0 %v1532
        %1913 = vmatpush.bf16.msra.mxu0 %v1528
        %1914 = vmatpush.bf16.msra.mxu0 %v1524
        %1915 = vmatpush.bf16.msra.mxu0 %v1520
        %1916 = vmatpush.bf16.msra.mxu0 %v1516
        %1917 = vmatmul.bf16.gmra.mxu0 %v953
        %v1918 = vpop.f32.mrf.mxu0
        %v1919 = vadd.f32 %v1900, %v1918
        %v1920 = vpop.f32.mrf.mxu0
        %v1921 = vadd.f32 %v1902, %v1920
        %1922 = vmatmul.bf16.gmra.mxu0 %v957
        %v1923 = vpop.f32.mrf.mxu0
        %v1924 = vadd.f32 %v1905, %v1923
        %v1925 = vpop.f32.mrf.mxu0
        %v1926 = vadd.f32 %v1907, %v1925
        %1927 = vdwg.mxu0
        %1928 = vmatpush.bf16.msra.mxu0 %v1576
        %1929 = vmatpush.bf16.msra.mxu0 %v1572
        %1930 = vmatpush.bf16.msra.mxu0 %v1568
        %1931 = vmatpush.bf16.msra.mxu0 %v1564
        %1932 = vmatpush.bf16.msra.mxu0 %v1560
        %1933 = vmatpush.bf16.msra.mxu0 %v1556
        %1934 = vmatpush.bf16.msra.mxu0 %v1552
        %1935 = vmatpush.bf16.msra.mxu0 %v1548
        %1936 = vmatmul.bf16.gmra.mxu0 %v954
        %v1937 = vpop.f32.mrf.mxu0
        %v1938 = vadd.f32 %v1919, %v1937
        %v1939 = vpop.f32.mrf.mxu0
        %v1940 = vadd.f32 %v1921, %v1939
        %1941 = vmatmul.bf16.gmra.mxu0 %v958
        %v1942 = vpop.f32.mrf.mxu0
        %v1943 = vadd.f32 %v1924, %v1942
        %v1944 = vpop.f32.mrf.mxu0
        %v1945 = vadd.f32 %v1926, %v1944
        %1946 = vdwg.mxu0
        %1947 = vmatpush.bf16.msra.mxu0 %v1608
        %1948 = vmatpush.bf16.msra.mxu0 %v1604
        %1949 = vmatpush.bf16.msra.mxu0 %v1600
        %1950 = vmatpush.bf16.msra.mxu0 %v1596
        %1951 = vmatpush.bf16.msra.mxu0 %v1592
        %1952 = vmatpush.bf16.msra.mxu0 %v1588
        %1953 = vmatpush.bf16.msra.mxu0 %v1584
        %1954 = vmatpush.bf16.msra.mxu0 %v1580
        %1955 = vmatmul.bf16.gmra.mxu0 %v955
        %v1956 = vpop.f32.mrf.mxu0
        %v1957 = vadd.f32 %v1938, %v1956
        %v1958 = vpop.f32.mrf.mxu0
        %v1959 = vadd.f32 %v1940, %v1958
        %1960 = vmatmul.bf16.gmra.mxu0 %v959
        %v1961 = vpop.f32.mrf.mxu0
        %v1962 = vadd.f32 %v1943, %v1961
        %v1963 = vpop.f32.mrf.mxu0
        %v1964 = vadd.f32 %v1945, %v1963
        %1965 = vdwg.mxu0
        %1966 = vmatpush.bf16.msra.mxu0 %v1513
        %1967 = vmatpush.bf16.msra.mxu0 %v1509
        %1968 = vmatpush.bf16.msra.mxu0 %v1505
        %1969 = vmatpush.bf16.msra.mxu0 %v1501
        %1970 = vmatpush.bf16.msra.mxu0 %v1497
        %1971 = vmatpush.bf16.msra.mxu0 %v1493
        %1972 = vmatpush.bf16.msra.mxu0 %v1489
        %1973 = vmatpush.bf16.msra.mxu0 %v1485
        %1974 = vmatmul.bf16.gmra.mxu0 %v952
        %v1975 = vpop.f32.mrf.mxu0
        %v1976 = vadd.f32 %v1093, %v1975
        %v1977 = vpop.f32.mrf.mxu0
        %v1978 = vadd.f32 %v1093, %v1977
        %1979 = vmatmul.bf16.gmra.mxu0 %v956
        %v1980 = vpop.f32.mrf.mxu0
        %v1981 = vadd.f32 %v1093, %v1980
        %v1982 = vpop.f32.mrf.mxu0
        %v1983 = vadd.f32 %v1093, %v1982
        %1984 = vdwg.mxu0
        %1985 = vmatpush.bf16.msra.mxu0 %v1545
        %1986 = vmatpush.bf16.msra.mxu0 %v1541
        %1987 = vmatpush.bf16.msra.mxu0 %v1537
        %1988 = vmatpush.bf16.msra.mxu0 %v1533
        %1989 = vmatpush.bf16.msra.mxu0 %v1529
        %1990 = vmatpush.bf16.msra.mxu0 %v1525
        %1991 = vmatpush.bf16.msra.mxu0 %v1521
        %1992 = vmatpush.bf16.msra.mxu0 %v1517
        %1993 = vmatmul.bf16.gmra.mxu0 %v953
        %v1994 = vpop.f32.mrf.mxu0
        %v1995 = vadd.f32 %v1976, %v1994
        %v1996 = vpop.f32.mrf.mxu0
        %v1997 = vadd.f32 %v1978, %v1996
        %1998 = vmatmul.bf16.gmra.mxu0 %v957
        %v1999 = vpop.f32.mrf.mxu0
        %v2000 = vadd.f32 %v1981, %v1999
        %v2001 = vpop.f32.mrf.mxu0
        %v2002 = vadd.f32 %v1983, %v2001
        %2003 = vdwg.mxu0
        %2004 = vmatpush.bf16.msra.mxu0 %v1577
        %2005 = vmatpush.bf16.msra.mxu0 %v1573
        %2006 = vmatpush.bf16.msra.mxu0 %v1569
        %2007 = vmatpush.bf16.msra.mxu0 %v1565
        %2008 = vmatpush.bf16.msra.mxu0 %v1561
        %2009 = vmatpush.bf16.msra.mxu0 %v1557
        %2010 = vmatpush.bf16.msra.mxu0 %v1553
        %2011 = vmatpush.bf16.msra.mxu0 %v1549
        %2012 = vmatmul.bf16.gmra.mxu0 %v954
        %v2013 = vpop.f32.mrf.mxu0
        %v2014 = vadd.f32 %v1995, %v2013
        %v2015 = vpop.f32.mrf.mxu0
        %v2016 = vadd.f32 %v1997, %v2015
        %2017 = vmatmul.bf16.gmra.mxu0 %v958
        %v2018 = vpop.f32.mrf.mxu0
        %v2019 = vadd.f32 %v2000, %v2018
        %v2020 = vpop.f32.mrf.mxu0
        %v2021 = vadd.f32 %v2002, %v2020
        %2022 = vdwg.mxu0
        %2023 = vmatpush.bf16.msra.mxu0 %v1609
        %2024 = vmatpush.bf16.msra.mxu0 %v1605
        %2025 = vmatpush.bf16.msra.mxu0 %v1601
        %2026 = vmatpush.bf16.msra.mxu0 %v1597
        %2027 = vmatpush.bf16.msra.mxu0 %v1593
        %2028 = vmatpush.bf16.msra.mxu0 %v1589
        %2029 = vmatpush.bf16.msra.mxu0 %v1585
        %2030 = vmatpush.bf16.msra.mxu0 %v1581
        %2031 = vmatmul.bf16.gmra.mxu0 %v955
        %v2032 = vpop.f32.mrf.mxu0
        %v2033 = vadd.f32 %v2014, %v2032
        %v2034 = vpop.f32.mrf.mxu0
        %v2035 = vadd.f32 %v2016, %v2034
        %2036 = vmatmul.bf16.gmra.mxu0 %v959
        %v2037 = vpop.f32.mrf.mxu0
        %v2038 = vadd.f32 %v2019, %v2037
        %v2039 = vpop.f32.mrf.mxu0
        %v2040 = vadd.f32 %v2021, %v2039
        %2041 = vdwg.mxu0
        %v2042 = vpack.c.bf16 %v1881, %v1805
        %v2043 = vpack.c.bf16 %v2033, %v1957
        %v2044 = vpack.c.bf16 %v1883, %v1807
        %v2045 = vpack.c.bf16 %v2035, %v1959
        %v2046 = vpack.c.bf16 %v1886, %v1810
        %v2047 = vpack.c.bf16 %v2038, %v1962
        %v2048 = vpack.c.bf16 %v1888, %v1812
        %v2049 = vpack.c.bf16 %v2040, %v1964
        %v2050 = vunpack.c.l.bf16 %v2042
        %v2051 = vunpack.c.h.bf16 %v2042
        %v2052 = vunpack.c.l.bf16 %v2043
        %v2053 = vunpack.c.h.bf16 %v2043
        %v2054 = vunpack.c.l.bf16 %v2044
        %v2055 = vunpack.c.h.bf16 %v2044
        %v2056 = vunpack.c.l.bf16 %v2045
        %v2057 = vunpack.c.h.bf16 %v2045
        %v2058 = vunpack.c.l.bf16 %v2046
        %v2059 = vunpack.c.h.bf16 %v2046
        %v2060 = vunpack.c.l.bf16 %v2047
        %v2061 = vunpack.c.h.bf16 %v2047
        %v2062 = vunpack.c.l.bf16 %v2048
        %v2063 = vunpack.c.h.bf16 %v2048
        %v2064 = vunpack.c.l.bf16 %v2049
        %v2065 = vunpack.c.h.bf16 %v2049
        %v2066 = vmax.f32 %v2050, 0.0
        %v2067 = vmax.f32 %v2051, 0.0
        %v2068 = vmax.f32 %v2052, 0.0
        %v2069 = vmax.f32 %v2053, 0.0
        %v2070 = vmax.f32 %v2054, 0.0
        %v2071 = vmax.f32 %v2055, 0.0
        %v2072 = vmax.f32 %v2056, 0.0
        %v2073 = vmax.f32 %v2057, 0.0
        %v2074 = vmax.f32 %v2058, 0.0
        %v2075 = vmax.f32 %v2059, 0.0
        %v2076 = vmax.f32 %v2060, 0.0
        %v2077 = vmax.f32 %v2061, 0.0
        %v2078 = vmax.f32 %v2062, 0.0
        %v2079 = vmax.f32 %v2063, 0.0
        %v2080 = vmax.f32 %v2064, 0.0
        %v2081 = vmax.f32 %v2065, 0.0
        %v2082 = vpack.c.bf16 %v2070, %v2066
        %v2083 = vpack.c.bf16 %v2071, %v2067
        %v2084 = vpack.c.bf16 %v2072, %v2068
        %v2085 = vpack.c.bf16 %v2073, %v2069
        %v2086 = vpack.c.bf16 %v2078, %v2074
        %v2087 = vpack.c.bf16 %v2079, %v2075
        %v2088 = vpack.c.bf16 %v2080, %v2076
        %v2089 = vpack.c.bf16 %v2081, %v2077
        %v2090 = vld [vmem:[#allocation11] sm:$0xf]
        %v2091 = vld [vmem:[#allocation11 + $0x4] sm:$0xf]
        %v2092 = vld [vmem:[#allocation11 + $0x8] sm:$0xf]
        %v2093 = vld [vmem:[#allocation11 + $0xc] sm:$0xf]
        %v2094 = vld [vmem:[#allocation11 + $0x10] sm:$0xf]
        %v2095 = vld [vmem:[#allocation11 + $0x14] sm:$0xf]
        %v2096 = vld [vmem:[#allocation11 + $0x18] sm:$0xf]
        %v2097 = vld [vmem:[#allocation11 + $0x1c] sm:$0xf]
        %v2098 = vld [vmem:[#allocation11 + $0x20] sm:$0xf]
        %v2099 = vld [vmem:[#allocation11 + $0x24] sm:$0xf]
        %v2100 = vld [vmem:[#allocation11 + $0x28] sm:$0xf]
        %v2101 = vld [vmem:[#allocation11 + $0x2c] sm:$0xf]
        %v2102 = vld [vmem:[#allocation11 + $0x30] sm:$0xf]
        %v2103 = vld [vmem:[#allocation11 + $0x34] sm:$0xf]
        %v2104 = vld [vmem:[#allocation11 + $0x38] sm:$0xf]
        %v2105 = vld [vmem:[#allocation11 + $0x3c] sm:$0xf]
        %v2106 = vld [vmem:[#allocation11 + $0x40] sm:$0xf]
        %v2107 = vld [vmem:[#allocation11 + $0x44] sm:$0xf]
        %v2108 = vld [vmem:[#allocation11 + $0x48] sm:$0xf]
        %v2109 = vld [vmem:[#allocation11 + $0x4c] sm:$0xf]
        %v2110 = vld [vmem:[#allocation11 + $0x50] sm:$0xf]
        %v2111 = vld [vmem:[#allocation11 + $0x54] sm:$0xf]
        %v2112 = vld [vmem:[#allocation11 + $0x58] sm:$0xf]
        %v2113 = vld [vmem:[#allocation11 + $0x5c] sm:$0xf]
        %v2114 = vld [vmem:[#allocation11 + $0x60] sm:$0xf]
        %v2115 = vld [vmem:[#allocation11 + $0x64] sm:$0xf]
        %v2116 = vld [vmem:[#allocation11 + $0x68] sm:$0xf]
        %v2117 = vld [vmem:[#allocation11 + $0x6c] sm:$0xf]
        %v2118 = vld [vmem:[#allocation11 + $0x70] sm:$0xf]
        %v2119 = vld [vmem:[#allocation11 + $0x74] sm:$0xf]
        %v2120 = vld [vmem:[#allocation11 + $0x78] sm:$0xf]
        %v2121 = vld [vmem:[#allocation11 + $0x7c] sm:$0xf]
        %v2122 = vld [vmem:[#allocation11 + $0x80] sm:$0xf]
        %v2123 = vld [vmem:[#allocation11 + $0x84] sm:$0xf]
        %v2124 = vld [vmem:[#allocation11 + $0x88] sm:$0xf]
        %v2125 = vld [vmem:[#allocation11 + $0x8c] sm:$0xf]
        %v2126 = vld [vmem:[#allocation11 + $0x90] sm:$0xf]
        %v2127 = vld [vmem:[#allocation11 + $0x94] sm:$0xf]
        %v2128 = vld [vmem:[#allocation11 + $0x98] sm:$0xf]
        %v2129 = vld [vmem:[#allocation11 + $0x9c] sm:$0xf]
        %v2130 = vld [vmem:[#allocation11 + $0xa0] sm:$0xf]
        %v2131 = vld [vmem:[#allocation11 + $0xa4] sm:$0xf]
        %v2132 = vld [vmem:[#allocation11 + $0xa8] sm:$0xf]
        %v2133 = vld [vmem:[#allocation11 + $0xac] sm:$0xf]
        %v2134 = vld [vmem:[#allocation11 + $0xb0] sm:$0xf]
        %v2135 = vld [vmem:[#allocation11 + $0xb4] sm:$0xf]
        %v2136 = vld [vmem:[#allocation11 + $0xb8] sm:$0xf]
        %v2137 = vld [vmem:[#allocation11 + $0xbc] sm:$0xf]
        %v2138 = vld [vmem:[#allocation11 + $0xc0] sm:$0xf]
        %v2139 = vld [vmem:[#allocation11 + $0xc4] sm:$0xf]
        %v2140 = vld [vmem:[#allocation11 + $0xc8] sm:$0xf]
        %v2141 = vld [vmem:[#allocation11 + $0xcc] sm:$0xf]
        %v2142 = vld [vmem:[#allocation11 + $0xd0] sm:$0xf]
        %v2143 = vld [vmem:[#allocation11 + $0xd4] sm:$0xf]
        %v2144 = vld [vmem:[#allocation11 + $0xd8] sm:$0xf]
        %v2145 = vld [vmem:[#allocation11 + $0xdc] sm:$0xf]
        %v2146 = vld [vmem:[#allocation11 + $0xe0] sm:$0xf]
        %v2147 = vld [vmem:[#allocation11 + $0xe4] sm:$0xf]
        %v2148 = vld [vmem:[#allocation11 + $0xe8] sm:$0xf]
        %v2149 = vld [vmem:[#allocation11 + $0xec] sm:$0xf]
        %v2150 = vld [vmem:[#allocation11 + $0xf0] sm:$0xf]
        %v2151 = vld [vmem:[#allocation11 + $0xf4] sm:$0xf]
        %v2152 = vld [vmem:[#allocation11 + $0xf8] sm:$0xf]
        %v2153 = vld [vmem:[#allocation11 + $0xfc] sm:$0xf]
        %v2218 = vunpack.c.l.b16 %v2090
        %v2219 = vunpack.c.l.b16 %v2091
        %v2220 = vunpack.c.l.b16 %v2092
        %v2221 = vunpack.c.l.b16 %v2093
        %v2222 = vunpack.c.l.b16 %v2094
        %v2223 = vunpack.c.l.b16 %v2095
        %v2224 = vunpack.c.l.b16 %v2096
        %v2225 = vunpack.c.l.b16 %v2097
        %v2226 = vunpack.c.l.b16 %v2098
        %v2227 = vunpack.c.l.b16 %v2099
        %v2228 = vunpack.c.l.b16 %v2100
        %v2229 = vunpack.c.l.b16 %v2101
        %v2230 = vunpack.c.l.b16 %v2102
        %v2231 = vunpack.c.l.b16 %v2103
        %v2232 = vunpack.c.l.b16 %v2104
        %v2233 = vunpack.c.l.b16 %v2105
        %v2234 = vunpack.c.l.b16 %v2106
        %v2235 = vunpack.c.l.b16 %v2107
        %v2236 = vunpack.c.l.b16 %v2108
        %v2237 = vunpack.c.l.b16 %v2109
        %v2238 = vunpack.c.l.b16 %v2110
        %v2239 = vunpack.c.l.b16 %v2111
        %v2240 = vunpack.c.l.b16 %v2112
        %v2241 = vunpack.c.l.b16 %v2113
        %v2242 = vunpack.c.l.b16 %v2114
        %v2243 = vunpack.c.l.b16 %v2115
        %v2244 = vunpack.c.l.b16 %v2116
        %v2245 = vunpack.c.l.b16 %v2117
        %v2246 = vunpack.c.l.b16 %v2118
        %v2247 = vunpack.c.l.b16 %v2119
        %v2248 = vunpack.c.l.b16 %v2120
        %v2249 = vunpack.c.l.b16 %v2121
        %v2250 = vunpack.c.l.b16 %v2122
        %v2251 = vunpack.c.l.b16 %v2123
        %v2252 = vunpack.c.l.b16 %v2124
        %v2253 = vunpack.c.l.b16 %v2125
        %v2254 = vunpack.c.l.b16 %v2126
        %v2255 = vunpack.c.l.b16 %v2127
        %v2256 = vunpack.c.l.b16 %v2128
        %v2257 = vunpack.c.l.b16 %v2129
        %v2258 = vunpack.c.l.b16 %v2130
        %v2259 = vunpack.c.l.b16 %v2131
        %v2260 = vunpack.c.l.b16 %v2132
        %v2261 = vunpack.c.l.b16 %v2133
        %v2262 = vunpack.c.l.b16 %v2134
        %v2263 = vunpack.c.l.b16 %v2135
        %v2264 = vunpack.c.l.b16 %v2136
        %v2265 = vunpack.c.l.b16 %v2137
        %v2266 = vunpack.c.l.b16 %v2138
        %v2267 = vunpack.c.l.b16 %v2139
        %v2268 = vunpack.c.l.b16 %v2140
        %v2269 = vunpack.c.l.b16 %v2141
        %v2270 = vunpack.c.l.b16 %v2142
        %v2271 = vunpack.c.l.b16 %v2143
        %v2272 = vunpack.c.l.b16 %v2144
        %v2273 = vunpack.c.l.b16 %v2145
        %v2274 = vunpack.c.l.b16 %v2146
        %v2275 = vunpack.c.l.b16 %v2147
        %v2276 = vunpack.c.l.b16 %v2148
        %v2277 = vunpack.c.l.b16 %v2149
        %v2278 = vunpack.c.l.b16 %v2150
        %v2279 = vunpack.c.l.b16 %v2151
        %v2280 = vunpack.c.l.b16 %v2152
        %v2281 = vunpack.c.l.b16 %v2153
        %v2282 = vpack.c.b16 %v2219, %v2218
        %v2283 = vpack.c.b16 %v2221, %v2220
        %v2284 = vpack.c.b16 %v2223, %v2222
        %v2285 = vpack.c.b16 %v2225, %v2224
        %v2286 = vpack.c.b16 %v2227, %v2226
        %v2287 = vpack.c.b16 %v2229, %v2228
        %v2288 = vpack.c.b16 %v2231, %v2230
        %v2289 = vpack.c.b16 %v2233, %v2232
        %v2290 = vpack.c.b16 %v2235, %v2234
        %v2291 = vpack.c.b16 %v2237, %v2236
        %v2292 = vpack.c.b16 %v2239, %v2238
        %v2293 = vpack.c.b16 %v2241, %v2240
        %v2294 = vpack.c.b16 %v2243, %v2242
        %v2295 = vpack.c.b16 %v2245, %v2244
        %v2296 = vpack.c.b16 %v2247, %v2246
        %v2297 = vpack.c.b16 %v2249, %v2248
        %v2298 = vpack.c.b16 %v2251, %v2250
        %v2299 = vpack.c.b16 %v2253, %v2252
        %v2300 = vpack.c.b16 %v2255, %v2254
        %v2301 = vpack.c.b16 %v2257, %v2256
        %v2302 = vpack.c.b16 %v2259, %v2258
        %v2303 = vpack.c.b16 %v2261, %v2260
        %v2304 = vpack.c.b16 %v2263, %v2262
        %v2305 = vpack.c.b16 %v2265, %v2264
        %v2306 = vpack.c.b16 %v2267, %v2266
        %v2307 = vpack.c.b16 %v2269, %v2268
        %v2308 = vpack.c.b16 %v2271, %v2270
        %v2309 = vpack.c.b16 %v2273, %v2272
        %v2310 = vpack.c.b16 %v2275, %v2274
        %v2311 = vpack.c.b16 %v2277, %v2276
        %v2312 = vpack.c.b16 %v2279, %v2278
        %v2313 = vpack.c.b16 %v2281, %v2280
        %2346 = vmatpush.bf16.msra.mxu0 %v2289
        %2347 = vmatpush.bf16.msra.mxu0 %v2288
        %2348 = vmatpush.bf16.msra.mxu0 %v2287
        %2349 = vmatpush.bf16.msra.mxu0 %v2286
        %2350 = vmatpush.bf16.msra.mxu0 %v2285
        %2351 = vmatpush.bf16.msra.mxu0 %v2284
        %2352 = vmatpush.bf16.msra.mxu0 %v2283
        %2353 = vmatpush.bf16.msra.mxu0 %v2282
        %2354 = vmatmul.bf16.gmra.mxu0 %v2082
        %v2355 = vpop.f32.mrf.mxu0
        %v2356 = vadd.f32 0.0, %v2355
        %v2357 = vpop.f32.mrf.mxu0
        %v2358 = vadd.f32 0.0, %v2357
        %2359 = vmatmul.bf16.gmra.mxu0 %v2086
        %v2360 = vpop.f32.mrf.mxu0
        %v2361 = vadd.f32 0.0, %v2360
        %v2362 = vpop.f32.mrf.mxu0
        %v2363 = vadd.f32 0.0, %v2362
        %2364 = vdwg.mxu0
        %2365 = vmatpush.bf16.msra.mxu0 %v2297
        %2366 = vmatpush.bf16.msra.mxu0 %v2296
        %2367 = vmatpush.bf16.msra.mxu0 %v2295
        %2368 = vmatpush.bf16.msra.mxu0 %v2294
        %2369 = vmatpush.bf16.msra.mxu0 %v2293
        %2370 = vmatpush.bf16.msra.mxu0 %v2292
        %2371 = vmatpush.bf16.msra.mxu0 %v2291
        %2372 = vmatpush.bf16.msra.mxu0 %v2290
        %2373 = vmatmul.bf16.gmra.mxu0 %v2083
        %v2374 = vpop.f32.mrf.mxu0
        %v2375 = vadd.f32 %v2356, %v2374
        %v2376 = vpop.f32.mrf.mxu0
        %v2377 = vadd.f32 %v2358, %v2376
        %2378 = vmatmul.bf16.gmra.mxu0 %v2087
        %v2379 = vpop.f32.mrf.mxu0
        %v2380 = vadd.f32 %v2361, %v2379
        %v2381 = vpop.f32.mrf.mxu0
        %v2382 = vadd.f32 %v2363, %v2381
        %2383 = vdwg.mxu0
        %2384 = vmatpush.bf16.msra.mxu0 %v2305
        %2385 = vmatpush.bf16.msra.mxu0 %v2304
        %2386 = vmatpush.bf16.msra.mxu0 %v2303
        %2387 = vmatpush.bf16.msra.mxu0 %v2302
        %2388 = vmatpush.bf16.msra.mxu0 %v2301
        %2389 = vmatpush.bf16.msra.mxu0 %v2300
        %2390 = vmatpush.bf16.msra.mxu0 %v2299
        %2391 = vmatpush.bf16.msra.mxu0 %v2298
        %2392 = vmatmul.bf16.gmra.mxu0 %v2084
        %v2393 = vpop.f32.mrf.mxu0
        %v2394 = vadd.f32 %v2375, %v2393
        %v2395 = vpop.f32.mrf.mxu0
        %v2396 = vadd.f32 %v2377, %v2395
        %2397 = vmatmul.bf16.gmra.mxu0 %v2088
        %v2398 = vpop.f32.mrf.mxu0
        %v2399 = vadd.f32 %v2380, %v2398
        %v2400 = vpop.f32.mrf.mxu0
        %v2401 = vadd.f32 %v2382, %v2400
        %2402 = vdwg.mxu0
        %2403 = vmatpush.bf16.msra.mxu0 %v2313
        %2404 = vmatpush.bf16.msra.mxu0 %v2312
        %2405 = vmatpush.bf16.msra.mxu0 %v2311
        %2406 = vmatpush.bf16.msra.mxu0 %v2310
        %2407 = vmatpush.bf16.msra.mxu0 %v2309
        %2408 = vmatpush.bf16.msra.mxu0 %v2308
        %2409 = vmatpush.bf16.msra.mxu0 %v2307
        %2410 = vmatpush.bf16.msra.mxu0 %v2306
        %2411 = vmatmul.bf16.gmra.mxu0 %v2085
        %v2412 = vpop.f32.mrf.mxu0
        %v2413 = vadd.f32 %v2394, %v2412
        %v2414 = vpop.f32.mrf.mxu0
        %v2415 = vadd.f32 %v2396, %v2414
        %2416 = vmatmul.bf16.gmra.mxu0 %v2089
        %v2417 = vpop.f32.mrf.mxu0
        %v2418 = vadd.f32 %v2399, %v2417
        %v2419 = vpop.f32.mrf.mxu0
        %v2420 = vadd.f32 %v2401, %v2419
        %2421 = vdwg.mxu0
        %v2422 = vtanh.pop %v2413
        %v2423 = vtanh.pop %v2415
        %v2424 = vtanh.pop %v2418
        %v2425 = vtanh.pop %v2420
        %v2426 = vmul.f32 %v2422, 2.0
        %v2427 = vmul.f32 %v2423, 2.0
        %v2428 = vmul.f32 %v2424, 2.0
        %v2429 = vmul.f32 %v2425, 2.0
        %2430 = vst [vmem:[%s351] sm:$0xff] %v2426
        %2431 = vst [vmem:[%s351 + $0x8] sm:$0xff] %v2427
        %2432 = vst [vmem:[%s351 + $0x10] sm:$0xff] %v2428
        %2433 = vst [vmem:[%s351 + $0x18] sm:$0xff] %v2429
        %s2434 = sand.u32 %s165, 1
        %s2435 = scalar_lea.sflag [#allocation4], %s2434
        %s2436 = sand.u32 %s165, 1
        %s2437 = smul.addr %s2436, 32
        %s2438 = scalar_lea.vmem [#allocation13], %s2437
        // Predicated region
        $region69: #{tpu_custom_call.1} parent=43 // pred_check
          %p2439 = pneg %p175
        $region70: #{tpu_custom_call.1} parent=43 // pred_check_branch
          %2441 = sbr.rel (%p2439) target = $region72
        $region71: #{tpu_custom_call.1} parent=43 // pred_region
          %s2442 = smul.u32 4, %s26
          %2444 = vsyncadd %s2435, 0
          %s2445 = smul.addr %s2442, 8
          %s2446 = scalar_lea.hbm %s6, %s2445
          %s2447 = sshll.u32 %s2438, 4
          %s2448 = int_to_ptr.vmem [resolvable:$true] %s2447
          %s2449 = sshll.u32 %s2446, 4
          %s2450 = int_to_ptr.hbm [resolvable:$true] %s2449
          %2455 = dma.vmem_to_hbm [thread:$0]  %s2448, 512, %s2450, %s2435, 128, 128, 8
        $region72: #{tpu_custom_call.1} parent=43 // pred_fallthru
          _
      $region44: #{tpu_custom_call.1} parent=5 // pred_fallthru
        _
      %p2456 = scmp.le.s32.totalorder 2, %s21
      // Predicated region
      $region73: #{tpu_custom_call.1} parent=5 // pred_check
        %p2457 = pneg %p2456
      $region74: #{tpu_custom_call.1} parent=5 // pred_check_branch
        %2459 = sbr.rel (%p2457) target = $region76
      $region75: #{tpu_custom_call.1} parent=5 // pred_region
        %s2460 = ssub.s32 %s21, 2
        // Predicated region
        $region77: #{tpu_custom_call.1} parent=75 // pred_check
          %p2461 = pneg %p181
        $region78: #{tpu_custom_call.1} parent=75 // pred_check_branch
          %2463 = sbr.rel (%p2461) target = $region80
        $region79: #{tpu_custom_call.1} parent=75 // pred_region
          %s2464 = sand.u32 %s166, 1
          %s2465 = scalar_lea.sflag [#allocation4], %s2464
          %s2466 = sand.u32 %s166, 1
          %s2467 = smul.addr %s2466, 32
          %s2468 = scalar_lea.vmem [#allocation13], %s2467
          %2470 = dma.done %s2465, 512
        $region80: #{tpu_custom_call.1} parent=75 // pred_fallthru
          _
      $region76: #{tpu_custom_call.1} parent=5 // pred_fallthru
        _
    $region6: #{tpu_custom_call.1} parent=1 // loop_footer
      %s25 = sadd.s32 1, %s21
    $region7: #{tpu_custom_call.1} parent=1 // loop_footer_branch
      %20 = sbr.rel target = $region3
    $region8: #{tpu_custom_call.1} parent=1 // loop_exit
      _
    %2471 = vsyncpa [#allocation3], 1
    %s2472 = scalar_lea.sflag [#allocation3], 1
    %2473 = vsyncpa %s2472, 1
    %2474 = vsyncpa [#allocation6], 1
    %2475 = vsyncpa [#allocation9], 1
    %2476 = vsyncpa [#allocation12], 1
    %2477 = vsyncpa [#allocation4], 1
    %s2478 = scalar_lea.sflag [#allocation4], 1
    %2479 = vsyncpa %s2478, 1

</llo_original>
